<compile_context>
chip_gen: v5e
topology: v5e:2x2
jax: 0.10.0
libtpu: 0.0.40
codegen_flags: <defaults>
</compile_context>

<pallas_src>
import functools

import jax
import jax.numpy as jnp
from jax.experimental import pallas as pl
from jax.experimental.pallas import tpu as pltpu

_LOG_2PI = 1.8378770664093453  # log(2*pi)  (cancels in the simplified KL; kept for reference)


def _vae_nelbo_kernel(
    x_ref, eps_ref,
    w1_ref, b1_ref, wmulv_ref, bmulv_ref,
    wd1_ref, bd1_ref, wd2_ref, bd2_ref,
    out_ref,
    acc_ref,
    *, beta: float, inv_n: float, latent: int,
):
    i = pl.program_id(0)

    @pl.when(i == 0)
    def _():
        acc_ref[...] = jnp.zeros_like(acc_ref)

    x = x_ref[...]       # (TB, D) f32
    eps = eps_ref[...]   # (TB, L) f32

    # ---------------- Encoder: q(z|x) = N(mu, diag(exp(log_var))) ----------------
    h = jnp.dot(x.astype(jnp.bfloat16), w1_ref[...],
                preferred_element_type=jnp.float32) + b1_ref[...]
    h = jnp.maximum(h, 0.0)                                            # ReLU

    # Fused (mu | log_var) head: single lane-dense (TB,H) @ (H,2L) matmul.
    mulv = jnp.dot(h.astype(jnp.bfloat16), wmulv_ref[...],
                   preferred_element_type=jnp.float32) + bmulv_ref[...]
    mu = mulv[:, :latent]
    log_var = mulv[:, latent:]

    # Reparameterization trick
    std = jnp.exp(0.5 * log_var)
    z = mu + std * eps                                                 # (TB, L)

    # Monte-Carlo KL, simplified: (z - mu)^2 / var == eps^2, log(2*pi) cancels.
    # sum_L [ log q(z|x) - log p(z) ] = -0.5 * sum_L (log_var + eps^2 - z^2)
    kl = -0.5 * jnp.sum(log_var + eps * eps - z * z, axis=-1, keepdims=True)
    kl = kl * beta                                                     # (TB, 1)

    # ---------------- Decoder: Bernoulli log p(x|z) ----------------
    hd = jnp.dot(z.astype(jnp.bfloat16), wd1_ref[...],
                 preferred_element_type=jnp.float32) + bd1_ref[...]
    hd = jnp.maximum(hd, 0.0)                                          # ReLU
    logits = jnp.dot(hd.astype(jnp.bfloat16), wd2_ref[...],
                     preferred_element_type=jnp.float32) + bd2_ref[...]

    # log p(x|z) = x*logits - softplus(logits), summed over D -> (TB, 1)
    softplus = jnp.maximum(logits, 0.0) + jnp.log(1.0 + jnp.exp(-jnp.abs(logits)))
    recon = jnp.sum(x * logits - softplus, axis=-1, keepdims=True)

    # ---------------- Accumulate NELBO (reduction='mean') ----------------
    acc_ref[...] += kl - recon

    @pl.when(i == pl.num_programs(0) - 1)
    def _():
        out_ref[0, 0] = jnp.sum(acc_ref[...]) * inv_n


def vae_nelbo(x, eps, params, *, beta=1.0, block_b=128):
    """Full VAE forward pass (NELBO, reduction='mean') as one batch-tiled Pallas kernel."""
    B, D = x.shape
    L = eps.shape[1]

    # Batch tile: 128 rows fills the MXU/vreg sublane dimension; fall back to the
    # whole batch if it does not divide evenly (correctness over micro-tiling).
    tb = block_b if (B % block_b == 0) else B
    grid = (B // tb,)

    # Weights in bf16 (MXU-native, halves VMEM/HBM bytes); biases stay f32.
    w1 = params["w1"].astype(jnp.bfloat16)
    w_mulv = jnp.concatenate([params["w_mu"], params["w_lv"]], axis=1).astype(jnp.bfloat16)
    b_mulv = jnp.concatenate([params["b_mu"], params["b_lv"]], axis=1)
    wd1 = params["wd1"].astype(jnp.bfloat16)
    wd2 = params["wd2"].astype(jnp.bfloat16)
    b1, bd1, bd2 = params["b1"], params["bd1"], params["bd2"]

    def _resident(shape):
        # Full-array block, constant block index -> stays resident in VMEM across grid.
        return pl.BlockSpec(shape, lambda i: (0, 0))

    kernel = functools.partial(
        _vae_nelbo_kernel, beta=float(beta), inv_n=1.0 / float(B), latent=int(L))

    out = pl.pallas_call(
        kernel,
        out_shape=jax.ShapeDtypeStruct((1, 1), jnp.float32),
        grid_spec=pltpu.PrefetchScalarGridSpec(
            num_scalar_prefetch=0,
            grid=grid,
            in_specs=[
                pl.BlockSpec((tb, D), lambda i: (i, 0)),   # x tile
                pl.BlockSpec((tb, L), lambda i: (i, 0)),   # eps tile
                _resident(w1.shape), _resident(b1.shape),
                _resident(w_mulv.shape), _resident(b_mulv.shape),
                _resident(wd1.shape), _resident(bd1.shape),
                _resident(wd2.shape), _resident(bd2.shape),
            ],
            out_specs=pl.BlockSpec(memory_space=pltpu.SMEM),
            scratch_shapes=[pltpu.VMEM((tb, 1), jnp.float32)],   # per-row NELBO accumulator
        ),
        compiler_params=pltpu.CompilerParams(
            dimension_semantics=("arbitrary",),   # batch axis carries the accumulator
        ),
    )(x, eps, w1, b1, w_mulv, b_mulv, wd1, bd1, wd2, bd2)
    return out[0, 0]


def vae_nelbo_reference(x, eps, params, *, beta=1.0):
    """Pure-JAX f32 reference for correctness checking."""
    h = jax.nn.relu(x @ params["w1"] + params["b1"])
    mu = h @ params["w_mu"] + params["b_mu"]
    log_var = h @ params["w_lv"] + params["b_lv"]
    z = mu + jnp.exp(0.5 * log_var) * eps
    enc_lp = -0.5 * (_LOG_2PI + log_var + (z - mu) ** 2 * jnp.exp(-log_var))
    pri_lp = -0.5 * (_LOG_2PI + z * z)
    kl = beta * jnp.sum(enc_lp - pri_lp, axis=-1)
    hd = jax.nn.relu(z @ params["wd1"] + params["bd1"])
    logits = hd @ params["wd2"] + params["bd2"]
    recon = jnp.sum(x * logits - jax.nn.softplus(logits), axis=-1)
    return jnp.mean(kl - recon)


def init_params(key, d_in, d_hidden, d_latent):
    """Deterministic synthetic parameter init (scaled Gaussian)."""
    ks = jax.random.split(key, 6)

    def lin(k, fan_in, fan_out):
        w = jax.random.normal(k, (fan_in, fan_out), jnp.float32) / jnp.sqrt(fan_in)
        b = jnp.zeros((1, fan_out), jnp.float32)  # biases kept 2-D for VMEM layout
        return w, b

    w1, b1 = lin(ks[0], d_in, d_hidden)
    w_mu, b_mu = lin(ks[1], d_hidden, d_latent)
    w_lv, b_lv = lin(ks[2], d_hidden, d_latent)
    wd1, bd1 = lin(ks[3], d_latent, d_hidden)
    wd2, bd2 = lin(ks[4], d_hidden, d_in)
    return {
        "w1": w1, "b1": b1,
        "w_mu": w_mu, "b_mu": b_mu,
        "w_lv": w_lv, "b_lv": b_lv,
        "wd1": wd1, "bd1": bd1,
        "wd2": wd2, "bd2": bd2,
    }


if __name__ == "__main__":
    # B=256 with TB=128 exercises the batch grid (2 steps) while staying small.
    B, D, H, L = 256, 256, 128, 64

    key = jax.random.PRNGKey(0)
    k_x, k_eps, k_p = jax.random.split(key, 3)

    # x in [0, 1] (Bernoulli decoder target), eps ~ N(0, 1) for reparameterization.
    x = jax.random.uniform(k_x, (B, D), jnp.float32)
    eps = jax.random.normal(k_eps, (B, L), jnp.float32)
    params = init_params(k_p, D, H, L)

    loss = jax.block_until_ready(vae_nelbo(x, eps, params, beta=1.0))
    ref = jax.block_until_ready(vae_nelbo_reference(x, eps, params, beta=1.0))

    assert jnp.isfinite(loss), "kernel produced non-finite loss"
    assert jnp.allclose(loss, ref, rtol=2e-2, atol=2e-2), (loss, ref)
    print("KERNEL_OK")
</pallas_src>

<mosaic_0001>
module attributes {stable_mosaic.version = 11 : i64} {
  func.func @_vae_nelbo_kernel(%arg0: i32, %arg1: memref<128x256xf32, #tpu.memory_space<vmem>>, %arg2: memref<128x64xf32, #tpu.memory_space<vmem>>, %arg3: memref<256x128xbf16, #tpu.memory_space<vmem>>, %arg4: memref<1x128xf32, #tpu.memory_space<vmem>>, %arg5: memref<128x128xbf16, #tpu.memory_space<vmem>>, %arg6: memref<1x128xf32, #tpu.memory_space<vmem>>, %arg7: memref<64x128xbf16, #tpu.memory_space<vmem>>, %arg8: memref<1x128xf32, #tpu.memory_space<vmem>>, %arg9: memref<128x256xbf16, #tpu.memory_space<vmem>>, %arg10: memref<1x256xf32, #tpu.memory_space<vmem>>, %arg11: memref<1x1xf32, #tpu.memory_space<smem>>, %arg12: memref<128x1xf32, #tpu.memory_space<vmem>>) attributes {dimension_semantics = [#tpu.dimension_semantics<arbitrary>], iteration_bounds = array<i64: 2>, scalar_prefetch = 0 : i64, scratch_operands = 1 : i64, tpu.core_type = #tpu.core_type<tc>, window_params = [{transform_indices = @transform_0, window_bounds = array<i64: 128, 256>}, {transform_indices = @transform_1, window_bounds = array<i64: 128, 64>}, {pipeline_mode = #tpu.pipeline_mode<synchronous>, transform_indices = @transform_2, window_bounds = array<i64: 256, 128>}, {pipeline_mode = #tpu.pipeline_mode<synchronous>, transform_indices = @transform_3, window_bounds = array<i64: 1, 128>}, {pipeline_mode = #tpu.pipeline_mode<synchronous>, transform_indices = @transform_4, window_bounds = array<i64: 128, 128>}, {pipeline_mode = #tpu.pipeline_mode<synchronous>, transform_indices = @transform_5, window_bounds = array<i64: 1, 128>}, {pipeline_mode = #tpu.pipeline_mode<synchronous>, transform_indices = @transform_6, window_bounds = array<i64: 64, 128>}, {pipeline_mode = #tpu.pipeline_mode<synchronous>, transform_indices = @transform_7, window_bounds = array<i64: 1, 128>}, {pipeline_mode = #tpu.pipeline_mode<synchronous>, transform_indices = @transform_8, window_bounds = array<i64: 128, 256>}, {pipeline_mode = #tpu.pipeline_mode<synchronous>, transform_indices = @transform_9, window_bounds = array<i64: 1, 256>}, {transform_indices = @transform_10, window_bounds = array<i64: 1, 1>}]} {
    %c0_i32 = arith.constant 0 : i32
    %0 = arith.cmpi eq, %arg0, %c0_i32 : i32
    %1 = arith.extui %0 : i1 to i32
    %c0_i32_0 = arith.constant 0 : i32
    %2 = arith.cmpi ne, %1, %c0_i32_0 : i32
    scf.if %2 {
      %cst_38 = arith.constant 0.000000e+00 : f32
      %71 = vector.broadcast %cst_38 : f32 to vector<128x1xf32>
      %c0_39 = arith.constant 0 : index
      %c0_40 = arith.constant 0 : index
      %72 = vector.load %arg12[%c0_39, %c0_40] : memref<128x1xf32, #tpu.memory_space<vmem>>, vector<128x1xf32>
      tpu.vector_store %arg12[%c0_39, %c0_40], %71 {strides = array<i32>} : memref<128x1xf32, #tpu.memory_space<vmem>>, vector<128x1xf32>,
    } else {
    }
    %c0 = arith.constant 0 : index
    %c0_1 = arith.constant 0 : index
    %3 = vector.load %arg1[%c0, %c0_1] : memref<128x256xf32, #tpu.memory_space<vmem>>, vector<128x256xf32>
    %c0_2 = arith.constant 0 : index
    %c0_3 = arith.constant 0 : index
    %4 = vector.load %arg2[%c0_2, %c0_3] : memref<128x64xf32, #tpu.memory_space<vmem>>, vector<128x64xf32>
    %5 = arith.truncf %3 : vector<128x256xf32> to vector<128x256xbf16>
    %c0_4 = arith.constant 0 : index
    %c0_5 = arith.constant 0 : index
    %6 = vector.load %arg3[%c0_4, %c0_5] : memref<256x128xbf16, #tpu.memory_space<vmem>>, vector<256x128xbf16>
    %cst = arith.constant dense<0.000000e+00> : vector<128x128xf32>
    %7 = tpu.matmul %5, %6, %cst {dimension_numbers = #tpu.dot_dimension_numbers<[1], [0], [0], [1], [0, 0, 1, 1], [], []>} : vector<128x256xbf16>, vector<256x128xbf16>, vector<128x128xf32> -> vector<128x128xf32>
    %c0_6 = arith.constant 0 : index
    %c0_7 = arith.constant 0 : index
    %8 = vector.load %arg4[%c0_6, %c0_7] : memref<1x128xf32, #tpu.memory_space<vmem>>, vector<1x128xf32>
    %9 = vector.broadcast %8 : vector<1x128xf32> to vector<128x128xf32>
    %10 = arith.addf %7, %9 : vector<128x128xf32>
    %cst_8 = arith.constant 0.000000e+00 : f32
    %11 = vector.broadcast %cst_8 : f32 to vector<128x128xf32>
    %12 = arith.maximumf %10, %11 : vector<128x128xf32>
    %13 = arith.truncf %12 : vector<128x128xf32> to vector<128x128xbf16>
    %c0_9 = arith.constant 0 : index
    %c0_10 = arith.constant 0 : index
    %14 = vector.load %arg5[%c0_9, %c0_10] : memref<128x128xbf16, #tpu.memory_space<vmem>>, vector<128x128xbf16>
    %cst_11 = arith.constant dense<0.000000e+00> : vector<128x128xf32>
    %15 = tpu.matmul %13, %14, %cst_11 {dimension_numbers = #tpu.dot_dimension_numbers<[1], [0], [0], [1], [0, 0, 1, 1], [], []>} : vector<128x128xbf16>, vector<128x128xbf16>, vector<128x128xf32> -> vector<128x128xf32>
    %c0_12 = arith.constant 0 : index
    %c0_13 = arith.constant 0 : index
    %16 = vector.load %arg6[%c0_12, %c0_13] : memref<1x128xf32, #tpu.memory_space<vmem>>, vector<1x128xf32>
    %17 = vector.broadcast %16 : vector<1x128xf32> to vector<128x128xf32>
    %18 = arith.addf %15, %17 : vector<128x128xf32>
    %19 = vector.extract_strided_slice %18 {offsets = [0, 0], sizes = [128, 64], strides = [1, 1]} : vector<128x128xf32> to vector<128x64xf32>
    %20 = vector.extract_strided_slice %18 {offsets = [0, 64], sizes = [128, 64], strides = [1, 1]} : vector<128x128xf32> to vector<128x64xf32>
    %cst_14 = arith.constant 5.000000e-01 : f32
    %21 = vector.broadcast %cst_14 : f32 to vector<128x64xf32>
    %22 = arith.mulf %21, %20 : vector<128x64xf32>
    %23 = math.exp %22 : vector<128x64xf32>
    %24 = arith.mulf %23, %4 : vector<128x64xf32>
    %25 = arith.addf %19, %24 : vector<128x64xf32>
    %26 = arith.mulf %4, %4 : vector<128x64xf32>
    %27 = arith.addf %20, %26 : vector<128x64xf32>
    %28 = arith.mulf %25, %25 : vector<128x64xf32>
    %29 = arith.subf %27, %28 : vector<128x64xf32>
    %cst_15 = arith.constant dense<0.000000e+00> : vector<128xf32>
    %30 = vector.multi_reduction <add>, %29, %cst_15 [1] : vector<128x64xf32> to vector<128xf32>
    %31 = vector.shape_cast %30 : vector<128xf32> to vector<128x1xf32>
    %cst_16 = arith.constant -5.000000e-01 : f32
    %32 = vector.broadcast %cst_16 : f32 to vector<128x1xf32>
    %33 = arith.mulf %32, %31 : vector<128x1xf32>
    %cst_17 = arith.constant 1.000000e+00 : f32
    %34 = vector.broadcast %cst_17 : f32 to vector<128x1xf32>
    %35 = arith.mulf %33, %34 : vector<128x1xf32>
    %36 = arith.truncf %25 : vector<128x64xf32> to vector<128x64xbf16>
    %c0_18 = arith.constant 0 : index
    %c0_19 = arith.constant 0 : index
    %37 = vector.load %arg7[%c0_18, %c0_19] : memref<64x128xbf16, #tpu.memory_space<vmem>>, vector<64x128xbf16>
    %cst_20 = arith.constant dense<0.000000e+00> : vector<128x128xf32>
    %38 = tpu.matmul %36, %37, %cst_20 {dimension_numbers = #tpu.dot_dimension_numbers<[1], [0], [0], [1], [0, 0, 1, 1], [], []>} : vector<128x64xbf16>, vector<64x128xbf16>, vector<128x128xf32> -> vector<128x128xf32>
    %c0_21 = arith.constant 0 : index
    %c0_22 = arith.constant 0 : index
    %39 = vector.load %arg8[%c0_21, %c0_22] : memref<1x128xf32, #tpu.memory_space<vmem>>, vector<1x128xf32>
    %40 = vector.broadcast %39 : vector<1x128xf32> to vector<128x128xf32>
    %41 = arith.addf %38, %40 : vector<128x128xf32>
    %cst_23 = arith.constant 0.000000e+00 : f32
    %42 = vector.broadcast %cst_23 : f32 to vector<128x128xf32>
    %43 = arith.maximumf %41, %42 : vector<128x128xf32>
    %44 = arith.truncf %43 : vector<128x128xf32> to vector<128x128xbf16>
    %c0_24 = arith.constant 0 : index
    %c0_25 = arith.constant 0 : index
    %45 = vector.load %arg9[%c0_24, %c0_25] : memref<128x256xbf16, #tpu.memory_space<vmem>>, vector<128x256xbf16>
    %cst_26 = arith.constant dense<0.000000e+00> : vector<128x256xf32>
    %46 = tpu.matmul %44, %45, %cst_26 {dimension_numbers = #tpu.dot_dimension_numbers<[1], [0], [0], [1], [0, 0, 1, 1], [], []>} : vector<128x128xbf16>, vector<128x256xbf16>, vector<128x256xf32> -> vector<128x256xf32>
    %c0_27 = arith.constant 0 : index
    %c0_28 = arith.constant 0 : index
    %47 = vector.load %arg10[%c0_27, %c0_28] : memref<1x256xf32, #tpu.memory_space<vmem>>, vector<1x256xf32>
    %48 = vector.broadcast %47 : vector<1x256xf32> to vector<128x256xf32>
    %49 = arith.addf %46, %48 : vector<128x256xf32>
    %cst_29 = arith.constant 0.000000e+00 : f32
    %50 = vector.broadcast %cst_29 : f32 to vector<128x256xf32>
    %51 = arith.maximumf %49, %50 : vector<128x256xf32>
    %52 = math.absf %49 : vector<128x256xf32>
    %cst_30 = arith.constant 0.000000e+00 : f32
    %53 = vector.broadcast %cst_30 : f32 to vector<128x256xf32>
    %54 = arith.subf %53, %52 : vector<128x256xf32>
    %55 = math.exp %54 : vector<128x256xf32>
    %cst_31 = arith.constant 1.000000e+00 : f32
    %56 = vector.broadcast %cst_31 : f32 to vector<128x256xf32>
    %57 = arith.addf %56, %55 : vector<128x256xf32>
    %58 = math.log %57 : vector<128x256xf32>
    %59 = arith.addf %51, %58 : vector<128x256xf32>
    %60 = arith.mulf %3, %49 : vector<128x256xf32>
    %61 = arith.subf %60, %59 : vector<128x256xf32>
    %cst_32 = arith.constant dense<0.000000e+00> : vector<128xf32>
    %62 = vector.multi_reduction <add>, %61, %cst_32 [1] : vector<128x256xf32> to vector<128xf32>
    %63 = vector.shape_cast %62 : vector<128xf32> to vector<128x1xf32>
    %c0_33 = arith.constant 0 : index
    %c0_34 = arith.constant 0 : index
    %64 = vector.load %arg12[%c0_33, %c0_34] : memref<128x1xf32, #tpu.memory_space<vmem>>, vector<128x1xf32>
    %65 = arith.subf %35, %63 : vector<128x1xf32>
    %66 = arith.addf %64, %65 : vector<128x1xf32>
    %c0_35 = arith.constant 0 : index
    %c0_36 = arith.constant 0 : index
    %67 = vector.load %arg12[%c0_35, %c0_36] : memref<128x1xf32, #tpu.memory_space<vmem>>, vector<128x1xf32>
    tpu.vector_store %arg12[%c0_35, %c0_36], %66 {strides = array<i32>} : memref<128x1xf32, #tpu.memory_space<vmem>>, vector<128x1xf32>,
    %c1_i32 = arith.constant 1 : i32
    %68 = arith.cmpi eq, %arg0, %c1_i32 : i32
    %69 = arith.extui %68 : i1 to i32
    %c0_i32_37 = arith.constant 0 : i32
    %70 = arith.cmpi ne, %69, %c0_i32_37 : i32
    scf.if %70 {
      %c0_38 = arith.constant 0 : index
      %c0_39 = arith.constant 0 : index
      %71 = vector.load %arg12[%c0_38, %c0_39] : memref<128x1xf32, #tpu.memory_space<vmem>>, vector<128x1xf32>
      %72 = vector.shape_cast %71 : vector<128x1xf32> to vector<1x128x1xf32>
      %cst_40 = arith.constant dense<0.000000e+00> : vector<1xf32>
      %73 = vector.multi_reduction <add>, %72, %cst_40 [1, 2] : vector<1x128x1xf32> to vector<1xf32>
      %74 = vector.shape_cast %73 : vector<1xf32> to vector<1x1x1xf32>
      %75 = vector.extract %74[0, 0, 0] : f32 from vector<1x1x1xf32>
      %cst_41 = arith.constant 3.906250e-03 : f32
      %76 = arith.mulf %75, %cst_41 : f32
      %c0_42 = arith.constant 0 : index
      %c0_43 = arith.constant 0 : index
      %77 = memref.load %arg11[%c0_42, %c0_43] : memref<1x1xf32, #tpu.memory_space<smem>>
      memref.store %76, %arg11[%c0_42, %c0_43] : memref<1x1xf32, #tpu.memory_space<smem>>
    } else {
    }
    return
  }
  func.func @transform_0(%arg0: i32) -> (i32, i32) {
    %c0_i32 = arith.constant 0 : i32
    %c0_i32_0 = arith.constant 0 : i32
    return %arg0, %c0_i32 : i32, i32
  }
  func.func @transform_1(%arg0: i32) -> (i32, i32) {
    %c0_i32 = arith.constant 0 : i32
    %c0_i32_0 = arith.constant 0 : i32
    return %arg0, %c0_i32 : i32, i32
  }
  func.func @transform_2(%arg0: i32) -> (i32, i32) {
    %c0_i32 = arith.constant 0 : i32
    %c0_i32_0 = arith.constant 0 : i32
    %c0_i32_1 = arith.constant 0 : i32
    return %c0_i32, %c0_i32_0 : i32, i32
  }
  func.func @transform_3(%arg0: i32) -> (i32, i32) {
    %c0_i32 = arith.constant 0 : i32
    %c0_i32_0 = arith.constant 0 : i32
    %c0_i32_1 = arith.constant 0 : i32
    return %c0_i32, %c0_i32_0 : i32, i32
  }
  func.func @transform_4(%arg0: i32) -> (i32, i32) {
    %c0_i32 = arith.constant 0 : i32
    %c0_i32_0 = arith.constant 0 : i32
    %c0_i32_1 = arith.constant 0 : i32
    return %c0_i32, %c0_i32_0 : i32, i32
  }
  func.func @transform_5(%arg0: i32) -> (i32, i32) {
    %c0_i32 = arith.constant 0 : i32
    %c0_i32_0 = arith.constant 0 : i32
    %c0_i32_1 = arith.constant 0 : i32
    return %c0_i32, %c0_i32_0 : i32, i32
  }
  func.func @transform_6(%arg0: i32) -> (i32, i32) {
    %c0_i32 = arith.constant 0 : i32
    %c0_i32_0 = arith.constant 0 : i32
    %c0_i32_1 = arith.constant 0 : i32
    return %c0_i32, %c0_i32_0 : i32, i32
  }
  func.func @transform_7(%arg0: i32) -> (i32, i32) {
    %c0_i32 = arith.constant 0 : i32
    %c0_i32_0 = arith.constant 0 : i32
    %c0_i32_1 = arith.constant 0 : i32
    return %c0_i32, %c0_i32_0 : i32, i32
  }
  func.func @transform_8(%arg0: i32) -> (i32, i32) {
    %c0_i32 = arith.constant 0 : i32
    %c0_i32_0 = arith.constant 0 : i32
    %c0_i32_1 = arith.constant 0 : i32
    return %c0_i32, %c0_i32_0 : i32, i32
  }
  func.func @transform_9(%arg0: i32) -> (i32, i32) {
    %c0_i32 = arith.constant 0 : i32
    %c0_i32_0 = arith.constant 0 : i32
    %c0_i32_1 = arith.constant 0 : i32
    return %c0_i32, %c0_i32_0 : i32, i32
  }
  func.func @transform_10(%arg0: i32) -> (i32, i32) {
    %c0_i32 = arith.constant 0 : i32
    %c0_i32_0 = arith.constant 0 : i32
    %c0_i32_1 = arith.constant 0 : i32
    return %c0_i32, %c0_i32_0 : i32, i32
  }
}

</mosaic_0001>

<llo_original>
// kernel: tpu_custom_call.1
$region0: #{tpu_custom_call.1}
  #allocation0 [shape = 'u32[]', space=smem, size = 0x4, offset = 0x4, fixed_abs, tag = 'smem constant byte address 0x4 - core index']
  #allocation1 [shape = 'u32[72,128]{1,0:T(1,128)}', space=vmem, size = 0x9000, scoped, tag = 'internal scratch']
  #allocation2 [shape = 'f32[128,1]{1,0:T(8,128)}', space=vmem, size = 0x10000, scoped, tag = 'scratch operand']
  %s0 = inlined_call_operand.hbm [shape: f32[256,256], index: 0, kind: input, shape index: {}]
  %s1 = inlined_call_operand.vmem [shape: f32[256,64], index: 1, kind: input, shape index: {}]
  %s2 = inlined_call_operand.vmem [shape: bf16[256,128], index: 2, kind: input, shape index: {}]
  %s3 = inlined_call_operand.vmem [shape: f32[1,128], index: 3, kind: input, shape index: {}]
  %s4 = inlined_call_operand.vmem [shape: bf16[128,128], index: 4, kind: input, shape index: {}]
  %s5 = inlined_call_operand.vmem [shape: f32[1,128], index: 5, kind: input, shape index: {}]
  %s6 = inlined_call_operand.vmem [shape: bf16[64,128], index: 6, kind: input, shape index: {}]
  %s7 = inlined_call_operand.vmem [shape: f32[1,128], index: 7, kind: input, shape index: {}]
  %s8 = inlined_call_operand.vmem [shape: bf16[128,256], index: 8, kind: input, shape index: {}]
  %s9 = inlined_call_operand.vmem [shape: f32[1,256], index: 9, kind: input, shape index: {}]
  %s10 = inlined_call_operand.hbm [shape: f32[1,1], index: 10, kind: output, shape index: {}]
  %s11 = sld [smem:[#allocation0]]
  $region85: #{tpu_custom_call.1} parent=0
    _
  %s13 = ssub.s32 1, %s11
  %s14 = scalar_select 0, %s13, %s11
  $region1: #{tpu_custom_call.1} parent=0
    #allocation3 [shape = 'u8[262144]{0}', space=vmem, size = 0x40000, scoped, tag = 'input window, operand 0']
    #allocation4 [shape = 's32[2]{0}', space=sflag, size = 0x8, scoped, tag = 'scoped memory for tpu_custom_call.1']
    #allocation5 [shape = 's32[2]{0}', space=sflag, size = 0x8, scoped, tag = 'scoped memory for tpu_custom_call.1']
    #allocation6 [shape = 'u8[512]{0}', space=smem, size = 0x200, scoped, tag = 'output window, operand 0, single buffered']
    %15 = vsyncpa [#allocation4], 0
    %s16 = scalar_lea.sflag [#allocation4], 1
    %17 = vsyncpa %s16, 0
    %18 = vsyncpa [#allocation5], 0
    loop: start=0, step=1, limit=4
    $region2: #{tpu_custom_call.1} parent=1 // loop_pre_header
      _
    $region3: #{tpu_custom_call.1} parent=1 // loop_header
      %s20 = sphi 0, %s24
      %p21 = scmp.ge.s32.totalorder %s20, 4
      %s30 = sphi 0, %s32
      %s33 = sphi 0, %s30
      %s34 = sphi 0, %s33
      %s50 = sphi 0, %s34
      %s56 = sphi 0, %s58
      %s59 = sphi 0, %s56
      %s60 = sphi 0, %s59
      %s76 = sphi 0, %s60
      %s80 = sphi 0, %s80
      %s82 = sphi 0, %s80
      %s83 = sphi 0, %s82
      %s97 = sphi 0, %s83
      %s101 = sphi 0, %s101
      %s103 = sphi 0, %s101
      %s104 = sphi 0, %s103
      %s118 = sphi 0, %s104
      %s122 = sphi 0, %s122
      %s124 = sphi 0, %s122
      %s125 = sphi 0, %s124
      %s139 = sphi 0, %s125
      %s143 = sphi 0, %s143
      %s145 = sphi 0, %s143
      %s146 = sphi 0, %s145
      %s160 = sphi 0, %s146
      %s164 = sphi 0, %s164
      %s166 = sphi 0, %s164
      %s167 = sphi 0, %s166
      %s181 = sphi 0, %s167
      %s185 = sphi 0, %s185
      %s187 = sphi 0, %s185
      %s188 = sphi 0, %s187
      %s202 = sphi 0, %s188
      %s206 = sphi 0, %s206
      %s208 = sphi 0, %s206
      %s209 = sphi 0, %s208
      %s223 = sphi 0, %s209
      %s227 = sphi 0, %s227
      %s229 = sphi 0, %s227
      %s230 = sphi 0, %s229
      %s244 = sphi 0, %s230
      %s248 = sphi 0, %s248
      %s250 = sphi 0, %s248
      %s251 = sphi 0, %s250
      %s265 = sphi 0, %s251
    $region4: #{tpu_custom_call.1} parent=1 // loop_header_branch
      %23 = sbr.rel (%p21) target = $region8
    $region5: #{tpu_custom_call.1} parent=1 // loop_body
      %s25 = ssub.s32 %s20, 1
      %s26 = ssub.s32 %s20, 2
      %s27 = sadd.s32 %s20, 1
      %s28 = ssub.s32 %s20, %s27
      %p29 = scmp.eq.s32.totalorder %s28, 0
      %s31 = sadd.s32 %s30, 1
      %s32 = scalar_select %p29, %s30, %s31
      %p35 = pneg %p29
      %p36 = scmp.eq.s32.totalorder %s20, 1
      %p37 = por %p35, %p36
      %p38 = scmp.ne.s32.totalorder %s30, %s33
      %p39 = scmp.eq.s32.totalorder %s20, 0
      %p40 = por %p38, %p39
      %p41 = scmp.ne.s32.totalorder %s30, %s33
      %p42 = scmp.eq.s32.totalorder %s25, 1
      %p43 = por %p41, %p42
      %p44 = scmp.ne.s32.totalorder %s33, %s34
      %p45 = scmp.eq.s32.totalorder %s25, 0
      %p46 = por %p44, %p45
      %p47 = scmp.ne.s32.totalorder %s33, %s34
      %p48 = scmp.eq.s32.totalorder %s26, 1
      %p49 = por %p47, %p48
      %p51 = scmp.ne.s32.totalorder %s34, %s50
      %p52 = scmp.eq.s32.totalorder %s26, 0
      %p53 = por %p51, %p52
      %s54 = ssub.s32 %s20, %s27
      %p55 = scmp.eq.s32.totalorder %s54, 0
      %s57 = sadd.s32 %s56, 1
      %s58 = scalar_select %p55, %s56, %s57
      %p61 = pneg %p55
      %p62 = scmp.eq.s32.totalorder %s20, 1
      %p63 = por %p61, %p62
      %p64 = scmp.ne.s32.totalorder %s56, %s59
      %p65 = scmp.eq.s32.totalorder %s20, 0
      %p66 = por %p64, %p65
      %p67 = scmp.ne.s32.totalorder %s56, %s59
      %p68 = scmp.eq.s32.totalorder %s25, 1
      %p69 = por %p67, %p68
      %p70 = scmp.ne.s32.totalorder %s59, %s60
      %p71 = scmp.eq.s32.totalorder %s25, 0
      %p72 = por %p70, %p71
      %p73 = scmp.ne.s32.totalorder %s59, %s60
      %p74 = scmp.eq.s32.totalorder %s26, 1
      %p75 = por %p73, %p74
      %p77 = scmp.ne.s32.totalorder %s60, %s76
      %p78 = scmp.eq.s32.totalorder %s26, 0
      %p79 = por %p77, %p78
      %s81 = sadd.s32 %s80, 1
      %p84 = scmp.eq.s32.totalorder %s20, 1
      %p85 = scmp.ne.s32.totalorder %s80, %s82
      %p86 = scmp.eq.s32.totalorder %s20, 0
      %p87 = por %p85, %p86
      %p88 = scmp.ne.s32.totalorder %s80, %s82
      %p89 = scmp.eq.s32.totalorder %s25, 1
      %p90 = por %p88, %p89
      %p91 = scmp.ne.s32.totalorder %s82, %s83
      %p92 = scmp.eq.s32.totalorder %s25, 0
      %p93 = por %p91, %p92
      %p94 = scmp.ne.s32.totalorder %s82, %s83
      %p95 = scmp.eq.s32.totalorder %s26, 1
      %p96 = por %p94, %p95
      %p98 = scmp.ne.s32.totalorder %s83, %s97
      %p99 = scmp.eq.s32.totalorder %s26, 0
      %p100 = por %p98, %p99
      %s102 = sadd.s32 %s101, 1
      %p105 = scmp.eq.s32.totalorder %s20, 1
      %p106 = scmp.ne.s32.totalorder %s101, %s103
      %p107 = scmp.eq.s32.totalorder %s20, 0
      %p108 = por %p106, %p107
      %p109 = scmp.ne.s32.totalorder %s101, %s103
      %p110 = scmp.eq.s32.totalorder %s25, 1
      %p111 = por %p109, %p110
      %p112 = scmp.ne.s32.totalorder %s103, %s104
      %p113 = scmp.eq.s32.totalorder %s25, 0
      %p114 = por %p112, %p113
      %p115 = scmp.ne.s32.totalorder %s103, %s104
      %p116 = scmp.eq.s32.totalorder %s26, 1
      %p117 = por %p115, %p116
      %p119 = scmp.ne.s32.totalorder %s104, %s118
      %p120 = scmp.eq.s32.totalorder %s26, 0
      %p121 = por %p119, %p120
      %s123 = sadd.s32 %s122, 1
      %p126 = scmp.eq.s32.totalorder %s20, 1
      %p127 = scmp.ne.s32.totalorder %s122, %s124
      %p128 = scmp.eq.s32.totalorder %s20, 0
      %p129 = por %p127, %p128
      %p130 = scmp.ne.s32.totalorder %s122, %s124
      %p131 = scmp.eq.s32.totalorder %s25, 1
      %p132 = por %p130, %p131
      %p133 = scmp.ne.s32.totalorder %s124, %s125
      %p134 = scmp.eq.s32.totalorder %s25, 0
      %p135 = por %p133, %p134
      %p136 = scmp.ne.s32.totalorder %s124, %s125
      %p137 = scmp.eq.s32.totalorder %s26, 1
      %p138 = por %p136, %p137
      %p140 = scmp.ne.s32.totalorder %s125, %s139
      %p141 = scmp.eq.s32.totalorder %s26, 0
      %p142 = por %p140, %p141
      %s144 = sadd.s32 %s143, 1
      %p147 = scmp.eq.s32.totalorder %s20, 1
      %p148 = scmp.ne.s32.totalorder %s143, %s145
      %p149 = scmp.eq.s32.totalorder %s20, 0
      %p150 = por %p148, %p149
      %p151 = scmp.ne.s32.totalorder %s143, %s145
      %p152 = scmp.eq.s32.totalorder %s25, 1
      %p153 = por %p151, %p152
      %p154 = scmp.ne.s32.totalorder %s145, %s146
      %p155 = scmp.eq.s32.totalorder %s25, 0
      %p156 = por %p154, %p155
      %p157 = scmp.ne.s32.totalorder %s145, %s146
      %p158 = scmp.eq.s32.totalorder %s26, 1
      %p159 = por %p157, %p158
      %p161 = scmp.ne.s32.totalorder %s146, %s160
      %p162 = scmp.eq.s32.totalorder %s26, 0
      %p163 = por %p161, %p162
      %s165 = sadd.s32 %s164, 1
      %p168 = scmp.eq.s32.totalorder %s20, 1
      %p169 = scmp.ne.s32.totalorder %s164, %s166
      %p170 = scmp.eq.s32.totalorder %s20, 0
      %p171 = por %p169, %p170
      %p172 = scmp.ne.s32.totalorder %s164, %s166
      %p173 = scmp.eq.s32.totalorder %s25, 1
      %p174 = por %p172, %p173
      %p175 = scmp.ne.s32.totalorder %s166, %s167
      %p176 = scmp.eq.s32.totalorder %s25, 0
      %p177 = por %p175, %p176
      %p178 = scmp.ne.s32.totalorder %s166, %s167
      %p179 = scmp.eq.s32.totalorder %s26, 1
      %p180 = por %p178, %p179
      %p182 = scmp.ne.s32.totalorder %s167, %s181
      %p183 = scmp.eq.s32.totalorder %s26, 0
      %p184 = por %p182, %p183
      %s186 = sadd.s32 %s185, 1
      %p189 = scmp.eq.s32.totalorder %s20, 1
      %p190 = scmp.ne.s32.totalorder %s185, %s187
      %p191 = scmp.eq.s32.totalorder %s20, 0
      %p192 = por %p190, %p191
      %p193 = scmp.ne.s32.totalorder %s185, %s187
      %p194 = scmp.eq.s32.totalorder %s25, 1
      %p195 = por %p193, %p194
      %p196 = scmp.ne.s32.totalorder %s187, %s188
      %p197 = scmp.eq.s32.totalorder %s25, 0
      %p198 = por %p196, %p197
      %p199 = scmp.ne.s32.totalorder %s187, %s188
      %p200 = scmp.eq.s32.totalorder %s26, 1
      %p201 = por %p199, %p200
      %p203 = scmp.ne.s32.totalorder %s188, %s202
      %p204 = scmp.eq.s32.totalorder %s26, 0
      %p205 = por %p203, %p204
      %s207 = sadd.s32 %s206, 1
      %p210 = scmp.eq.s32.totalorder %s20, 1
      %p211 = scmp.ne.s32.totalorder %s206, %s208
      %p212 = scmp.eq.s32.totalorder %s20, 0
      %p213 = por %p211, %p212
      %p214 = scmp.ne.s32.totalorder %s206, %s208
      %p215 = scmp.eq.s32.totalorder %s25, 1
      %p216 = por %p214, %p215
      %p217 = scmp.ne.s32.totalorder %s208, %s209
      %p218 = scmp.eq.s32.totalorder %s25, 0
      %p219 = por %p217, %p218
      %p220 = scmp.ne.s32.totalorder %s208, %s209
      %p221 = scmp.eq.s32.totalorder %s26, 1
      %p222 = por %p220, %p221
      %p224 = scmp.ne.s32.totalorder %s209, %s223
      %p225 = scmp.eq.s32.totalorder %s26, 0
      %p226 = por %p224, %p225
      %s228 = sadd.s32 %s227, 1
      %p231 = scmp.eq.s32.totalorder %s20, 1
      %p232 = scmp.ne.s32.totalorder %s227, %s229
      %p233 = scmp.eq.s32.totalorder %s20, 0
      %p234 = por %p232, %p233
      %p235 = scmp.ne.s32.totalorder %s227, %s229
      %p236 = scmp.eq.s32.totalorder %s25, 1
      %p237 = por %p235, %p236
      %p238 = scmp.ne.s32.totalorder %s229, %s230
      %p239 = scmp.eq.s32.totalorder %s25, 0
      %p240 = por %p238, %p239
      %p241 = scmp.ne.s32.totalorder %s229, %s230
      %p242 = scmp.eq.s32.totalorder %s26, 1
      %p243 = por %p241, %p242
      %p245 = scmp.ne.s32.totalorder %s230, %s244
      %p246 = scmp.eq.s32.totalorder %s26, 0
      %p247 = por %p245, %p246
      %s249 = sadd.s32 %s248, 1
      %p252 = scmp.eq.s32.totalorder %s20, 1
      %p253 = scmp.ne.s32.totalorder %s248, %s250
      %p254 = scmp.eq.s32.totalorder %s20, 0
      %p255 = por %p253, %p254
      %p256 = scmp.ne.s32.totalorder %s248, %s250
      %p257 = scmp.eq.s32.totalorder %s25, 1
      %p258 = por %p256, %p257
      %p259 = scmp.ne.s32.totalorder %s250, %s251
      %p260 = scmp.eq.s32.totalorder %s25, 0
      %p261 = por %p259, %p260
      %p262 = scmp.ne.s32.totalorder %s250, %s251
      %p263 = scmp.eq.s32.totalorder %s26, 1
      %p264 = por %p262, %p263
      %p266 = scmp.ne.s32.totalorder %s251, %s265
      %p267 = scmp.eq.s32.totalorder %s26, 0
      %p268 = por %p266, %p267
      %p269 = scmp.le.s32.totalorder 1, %s20
      %p270 = scmp.lt.s32.totalorder %s20, 3
      %p271 = pnand %p269, %p270
      %p272 = pneg %p271
      // Predicated region
      $region9: #{tpu_custom_call.1} parent=5 // pred_check
        _
      $region10: #{tpu_custom_call.1} parent=5 // pred_check_branch
        %274 = sbr.rel (%p271) target = $region12
      $region11: #{tpu_custom_call.1} parent=5 // pred_region
        %s275 = ssub.s32 %s20, 1
        // Predicated region
        $region13: #{tpu_custom_call.1} parent=11 // pred_check
          %p276 = pneg %p93
        $region14: #{tpu_custom_call.1} parent=11 // pred_check_branch
          %278 = sbr.rel (%p276) target = $region16
        $region15: #{tpu_custom_call.1} parent=11 // pred_region
          _
        $region16: #{tpu_custom_call.1} parent=11 // pred_fallthru
          _
        // Predicated region
        $region17: #{tpu_custom_call.1} parent=11 // pred_check
          %p279 = pneg %p114
        $region18: #{tpu_custom_call.1} parent=11 // pred_check_branch
          %281 = sbr.rel (%p279) target = $region20
        $region19: #{tpu_custom_call.1} parent=11 // pred_region
          _
        $region20: #{tpu_custom_call.1} parent=11 // pred_fallthru
          _
        // Predicated region
        $region21: #{tpu_custom_call.1} parent=11 // pred_check
          %p282 = pneg %p135
        $region22: #{tpu_custom_call.1} parent=11 // pred_check_branch
          %284 = sbr.rel (%p282) target = $region24
        $region23: #{tpu_custom_call.1} parent=11 // pred_region
          _
        $region24: #{tpu_custom_call.1} parent=11 // pred_fallthru
          _
        // Predicated region
        $region25: #{tpu_custom_call.1} parent=11 // pred_check
          %p285 = pneg %p156
        $region26: #{tpu_custom_call.1} parent=11 // pred_check_branch
          %287 = sbr.rel (%p285) target = $region28
        $region27: #{tpu_custom_call.1} parent=11 // pred_region
          _
        $region28: #{tpu_custom_call.1} parent=11 // pred_fallthru
          _
        // Predicated region
        $region29: #{tpu_custom_call.1} parent=11 // pred_check
          %p288 = pneg %p177
        $region30: #{tpu_custom_call.1} parent=11 // pred_check_branch
          %290 = sbr.rel (%p288) target = $region32
        $region31: #{tpu_custom_call.1} parent=11 // pred_region
          _
        $region32: #{tpu_custom_call.1} parent=11 // pred_fallthru
          _
        // Predicated region
        $region33: #{tpu_custom_call.1} parent=11 // pred_check
          %p291 = pneg %p198
        $region34: #{tpu_custom_call.1} parent=11 // pred_check_branch
          %293 = sbr.rel (%p291) target = $region36
        $region35: #{tpu_custom_call.1} parent=11 // pred_region
          _
        $region36: #{tpu_custom_call.1} parent=11 // pred_fallthru
          _
        // Predicated region
        $region37: #{tpu_custom_call.1} parent=11 // pred_check
          %p294 = pneg %p219
        $region38: #{tpu_custom_call.1} parent=11 // pred_check_branch
          %296 = sbr.rel (%p294) target = $region40
        $region39: #{tpu_custom_call.1} parent=11 // pred_region
          _
        $region40: #{tpu_custom_call.1} parent=11 // pred_fallthru
          _
        // Predicated region
        $region41: #{tpu_custom_call.1} parent=11 // pred_check
          %p297 = pneg %p240
        $region42: #{tpu_custom_call.1} parent=11 // pred_check_branch
          %299 = sbr.rel (%p297) target = $region44
        $region43: #{tpu_custom_call.1} parent=11 // pred_region
          _
        $region44: #{tpu_custom_call.1} parent=11 // pred_fallthru
          _
      $region12: #{tpu_custom_call.1} parent=5 // pred_fallthru
        _
      %p300 = scmp.lt.s32.totalorder %s20, 2
      // Predicated region
      $region45: #{tpu_custom_call.1} parent=5 // pred_check
        %p301 = pneg %p300
      $region46: #{tpu_custom_call.1} parent=5 // pred_check_branch
        %303 = sbr.rel (%p301) target = $region48
      $region47: #{tpu_custom_call.1} parent=5 // pred_region
        // Predicated region
        $region49: #{tpu_custom_call.1} parent=47 // pred_check
          %p304 = pneg %p40
        $region50: #{tpu_custom_call.1} parent=47 // pred_check_branch
          %306 = sbr.rel (%p304) target = $region52
        $region51: #{tpu_custom_call.1} parent=47 // pred_region
          %s307 = sand.u32 %s30, 1
          %s308 = scalar_lea.sflag [#allocation4], %s307
          %s309 = sand.u32 %s30, 1
          %s310 = smul.addr %s309, 256
          %s311 = scalar_lea.vmem [#allocation3], %s310
          %s312 = smul.u32 16, %s20
          %314 = vsyncadd %s308, 0
          %s315 = smul.addr %s312, 2
          %s316 = smul.addr %s315, 8
          %s317 = scalar_lea.hbm %s0, %s316
          %s318 = sshll.u32 %s317, 4
          %s319 = int_to_ptr.hbm [resolvable:$true] %s318
          %s320 = sshll.u32 %s311, 4
          %s321 = int_to_ptr.vmem [resolvable:$true] %s320
          %326 = dma.hbm_to_vmem [thread:$0]  %s319, 4096, %s321, %s308, 256, 256, 16
        $region52: #{tpu_custom_call.1} parent=47 // pred_fallthru
          _
        // Predicated region
        $region53: #{tpu_custom_call.1} parent=47 // pred_check
          %p327 = pneg %p66
        $region54: #{tpu_custom_call.1} parent=47 // pred_check_branch
          %329 = sbr.rel (%p327) target = $region56
        $region55: #{tpu_custom_call.1} parent=47 // pred_region
          %s330 = smul.u32 16, %s20
          %p331 = scmp.lt.s32.totalorder %s330, 31
          %s332 = scalar_select %p331, %s330, 31
          %s333 = smul.addr %s332, 8
          %s334 = scalar_lea.vmem %s1, %s333
          %s335 = smul.u32 16, %s20
        $region56: #{tpu_custom_call.1} parent=47 // pred_fallthru
          _
      $region48: #{tpu_custom_call.1} parent=5 // pred_fallthru
        _
      %p336 = scmp.le.s32.totalorder 1, %s20
      %p337 = scmp.lt.s32.totalorder %s20, 3
      %p338 = pnand %p336, %p337
      %p339 = pneg %p338
      // Predicated region
      $region57: #{tpu_custom_call.1} parent=5 // pred_check
        _
      $region58: #{tpu_custom_call.1} parent=5 // pred_check_branch
        %341 = sbr.rel (%p338) target = $region60
      $region59: #{tpu_custom_call.1} parent=5 // pred_region
        %s342 = ssub.s32 %s20, 1
        %s343 = sand.u32 %s33, 1
        %s344 = scalar_lea.sflag [#allocation4], %s343
        %s345 = sand.u32 %s33, 1
        %s346 = smul.addr %s345, 256
        %s347 = scalar_lea.vmem [#allocation3], %s346
        // Predicated region
        $region61: #{tpu_custom_call.1} parent=59 // pred_check
          %p348 = pneg %p46
        $region62: #{tpu_custom_call.1} parent=59 // pred_check_branch
          %350 = sbr.rel (%p348) target = $region64
        $region63: #{tpu_custom_call.1} parent=59 // pred_region
          %352 = dma.done %s344, 4096
        $region64: #{tpu_custom_call.1} parent=59 // pred_fallthru
          _
        %s353 = sand.u32 %s33, 1
        %s354 = scalar_lea.sflag [#allocation4], %s353
        %s355 = sand.u32 %s33, 1
        %s356 = smul.addr %s355, 256
        %s357 = scalar_lea.vmem [#allocation3], %s356
        %p358 = pneg %p46
        %p359 = pneg %p43
        %s360 = smul.u32 16, %s25
        %p361 = scmp.lt.s32.totalorder %s360, 31
        %s362 = scalar_select %p361, %s360, 31
        %s363 = smul.addr %s362, 8
        %s364 = scalar_lea.vmem %s1, %s363
        %p365 = pneg %p72
        %p366 = pneg %p69
        %p367 = pneg %p93
        %p368 = pneg %p90
        %p369 = pneg %p114
        %p370 = pneg %p111
        %p371 = pneg %p135
        %p372 = pneg %p132
        %p373 = pneg %p156
        %p374 = pneg %p153
        %p375 = pneg %p177
        %p376 = pneg %p174
        %p377 = pneg %p198
        %p378 = pneg %p195
        %p379 = pneg %p219
        %p380 = pneg %p216
        %p381 = pneg %p240
        %p382 = pneg %p237
        %p383 = pneg %p261
        %p384 = pneg %p258
        %s385 = smul.u32 16, %s25
        %s386 = smul.u32 16, %s25
        %p387 = scmp.lt.s32.totalorder %s386, 31
        %s388 = scalar_select %p387, %s386, 31
        %s389 = smul.addr %s388, 8
        %s390 = scalar_lea.vmem %s1, %s389
        %s391 = smul.u32 16, %s25
        %p393 = scmp.eq.s32.totalorder %s25, 0
        // Predicated region
        $region65: #{tpu_custom_call.1} parent=59 // pred_check
          %p394 = pneg %p393
        $region66: #{tpu_custom_call.1} parent=59 // pred_check_branch
          %396 = sbr.rel (%p394) target = $region68
        $region67: #{tpu_custom_call.1} parent=59 // pred_region
          %vm397 = vcmask 7168
          %398 = vst.msk [vmem:[#allocation2] sm:$0xff] %vm397, 0.0
          %399 = vst.msk [vmem:[#allocation2 + $0x8] sm:$0xff] %vm397, 0.0
          %400 = vst.msk [vmem:[#allocation2 + $0x10] sm:$0xff] %vm397, 0.0
          %401 = vst.msk [vmem:[#allocation2 + $0x18] sm:$0xff] %vm397, 0.0
          %402 = vst.msk [vmem:[#allocation2 + $0x20] sm:$0xff] %vm397, 0.0
          %403 = vst.msk [vmem:[#allocation2 + $0x28] sm:$0xff] %vm397, 0.0
          %404 = vst.msk [vmem:[#allocation2 + $0x30] sm:$0xff] %vm397, 0.0
          %405 = vst.msk [vmem:[#allocation2 + $0x38] sm:$0xff] %vm397, 0.0
          %406 = vst.msk [vmem:[#allocation2 + $0x40] sm:$0xff] %vm397, 0.0
          %407 = vst.msk [vmem:[#allocation2 + $0x48] sm:$0xff] %vm397, 0.0
          %408 = vst.msk [vmem:[#allocation2 + $0x50] sm:$0xff] %vm397, 0.0
          %409 = vst.msk [vmem:[#allocation2 + $0x58] sm:$0xff] %vm397, 0.0
          %410 = vst.msk [vmem:[#allocation2 + $0x60] sm:$0xff] %vm397, 0.0
          %411 = vst.msk [vmem:[#allocation2 + $0x68] sm:$0xff] %vm397, 0.0
          %412 = vst.msk [vmem:[#allocation2 + $0x70] sm:$0xff] %vm397, 0.0
          %413 = vst.msk [vmem:[#allocation2 + $0x78] sm:$0xff] %vm397, 0.0
        $region68: #{tpu_custom_call.1} parent=59 // pred_fallthru
          _
        %v414 = vld [vmem:[%s347] sm:$0xff]
        %v415 = vld [vmem:[%s347 + $0x8] sm:$0xff]
        %v416 = vld [vmem:[%s347 + $0x10] sm:$0xff]
        %v417 = vld [vmem:[%s347 + $0x18] sm:$0xff]
        %v418 = vld [vmem:[%s347 + $0x20] sm:$0xff]
        %v419 = vld [vmem:[%s347 + $0x28] sm:$0xff]
        %v420 = vld [vmem:[%s347 + $0x30] sm:$0xff]
        %v421 = vld [vmem:[%s347 + $0x38] sm:$0xff]
        %v422 = vld [vmem:[%s347 + $0x40] sm:$0xff]
        %v423 = vld [vmem:[%s347 + $0x48] sm:$0xff]
        %v424 = vld [vmem:[%s347 + $0x50] sm:$0xff]
        %v425 = vld [vmem:[%s347 + $0x58] sm:$0xff]
        %v426 = vld [vmem:[%s347 + $0x60] sm:$0xff]
        %v427 = vld [vmem:[%s347 + $0x68] sm:$0xff]
        %v428 = vld [vmem:[%s347 + $0x70] sm:$0xff]
        %v429 = vld [vmem:[%s347 + $0x78] sm:$0xff]
        %v430 = vld [vmem:[%s347 + $0x80] sm:$0xff]
        %v431 = vld [vmem:[%s347 + $0x88] sm:$0xff]
        %v432 = vld [vmem:[%s347 + $0x90] sm:$0xff]
        %v433 = vld [vmem:[%s347 + $0x98] sm:$0xff]
        %v434 = vld [vmem:[%s347 + $0xa0] sm:$0xff]
        %v435 = vld [vmem:[%s347 + $0xa8] sm:$0xff]
        %v436 = vld [vmem:[%s347 + $0xb0] sm:$0xff]
        %v437 = vld [vmem:[%s347 + $0xb8] sm:$0xff]
        %v438 = vld [vmem:[%s347 + $0xc0] sm:$0xff]
        %v439 = vld [vmem:[%s347 + $0xc8] sm:$0xff]
        %v440 = vld [vmem:[%s347 + $0xd0] sm:$0xff]
        %v441 = vld [vmem:[%s347 + $0xd8] sm:$0xff]
        %v442 = vld [vmem:[%s347 + $0xe0] sm:$0xff]
        %v443 = vld [vmem:[%s347 + $0xe8] sm:$0xff]
        %v444 = vld [vmem:[%s347 + $0xf0] sm:$0xff]
        %v445 = vld [vmem:[%s347 + $0xf8] sm:$0xff]
        %v446 = vld [vmem:[%s390] sm:$0xff]
        %v447 = vld [vmem:[%s390 + $0x8] sm:$0xff]
        %v448 = vld [vmem:[%s390 + $0x10] sm:$0xff]
        %v449 = vld [vmem:[%s390 + $0x18] sm:$0xff]
        %v450 = vld [vmem:[%s390 + $0x20] sm:$0xff]
        %v451 = vld [vmem:[%s390 + $0x28] sm:$0xff]
        %v452 = vld [vmem:[%s390 + $0x30] sm:$0xff]
        %v453 = vld [vmem:[%s390 + $0x38] sm:$0xff]
        %v454 = vld [vmem:[%s390 + $0x40] sm:$0xff]
        %v455 = vld [vmem:[%s390 + $0x48] sm:$0xff]
        %v456 = vld [vmem:[%s390 + $0x50] sm:$0xff]
        %v457 = vld [vmem:[%s390 + $0x58] sm:$0xff]
        %v458 = vld [vmem:[%s390 + $0x60] sm:$0xff]
        %v459 = vld [vmem:[%s390 + $0x68] sm:$0xff]
        %v460 = vld [vmem:[%s390 + $0x70] sm:$0xff]
        %v461 = vld [vmem:[%s390 + $0x78] sm:$0xff]
        %v462 = vpack.c.bf16 %v416, %v414
        %v463 = vpack.c.bf16 %v417, %v415
        %v464 = vpack.c.bf16 %v420, %v418
        %v465 = vpack.c.bf16 %v421, %v419
        %v466 = vpack.c.bf16 %v424, %v422
        %v467 = vpack.c.bf16 %v425, %v423
        %v468 = vpack.c.bf16 %v428, %v426
        %v469 = vpack.c.bf16 %v429, %v427
        %v470 = vpack.c.bf16 %v432, %v430
        %v471 = vpack.c.bf16 %v433, %v431
        %v472 = vpack.c.bf16 %v436, %v434
        %v473 = vpack.c.bf16 %v437, %v435
        %v474 = vpack.c.bf16 %v440, %v438
        %v475 = vpack.c.bf16 %v441, %v439
        %v476 = vpack.c.bf16 %v444, %v442
        %v477 = vpack.c.bf16 %v445, %v443
        %v478 = vld [vmem:[%s2] sm:$0xf]
        %v479 = vld [vmem:[%s2 + $0x4] sm:$0xf]
        %v480 = vld [vmem:[%s2 + $0x8] sm:$0xf]
        %v481 = vld [vmem:[%s2 + $0xc] sm:$0xf]
        %v482 = vld [vmem:[%s2 + $0x10] sm:$0xf]
        %v483 = vld [vmem:[%s2 + $0x14] sm:$0xf]
        %v484 = vld [vmem:[%s2 + $0x18] sm:$0xf]
        %v485 = vld [vmem:[%s2 + $0x1c] sm:$0xf]
        %v486 = vld [vmem:[%s2 + $0x20] sm:$0xf]
        %v487 = vld [vmem:[%s2 + $0x24] sm:$0xf]
        %v488 = vld [vmem:[%s2 + $0x28] sm:$0xf]
        %v489 = vld [vmem:[%s2 + $0x2c] sm:$0xf]
        %v490 = vld [vmem:[%s2 + $0x30] sm:$0xf]
        %v491 = vld [vmem:[%s2 + $0x34] sm:$0xf]
        %v492 = vld [vmem:[%s2 + $0x38] sm:$0xf]
        %v493 = vld [vmem:[%s2 + $0x3c] sm:$0xf]
        %v494 = vld [vmem:[%s2 + $0x40] sm:$0xf]
        %v495 = vld [vmem:[%s2 + $0x44] sm:$0xf]
        %v496 = vld [vmem:[%s2 + $0x48] sm:$0xf]
        %v497 = vld [vmem:[%s2 + $0x4c] sm:$0xf]
        %v498 = vld [vmem:[%s2 + $0x50] sm:$0xf]
        %v499 = vld [vmem:[%s2 + $0x54] sm:$0xf]
        %v500 = vld [vmem:[%s2 + $0x58] sm:$0xf]
        %v501 = vld [vmem:[%s2 + $0x5c] sm:$0xf]
        %v502 = vld [vmem:[%s2 + $0x60] sm:$0xf]
        %v503 = vld [vmem:[%s2 + $0x64] sm:$0xf]
        %v504 = vld [vmem:[%s2 + $0x68] sm:$0xf]
        %v505 = vld [vmem:[%s2 + $0x6c] sm:$0xf]
        %v506 = vld [vmem:[%s2 + $0x70] sm:$0xf]
        %v507 = vld [vmem:[%s2 + $0x74] sm:$0xf]
        %v508 = vld [vmem:[%s2 + $0x78] sm:$0xf]
        %v509 = vld [vmem:[%s2 + $0x7c] sm:$0xf]
        %v510 = vld [vmem:[%s3] sm:$0x1]
        %v512 = vperm.slane %v510, 0
        %v546 = vunpack.c.l.b16 %v478
        %v547 = vunpack.c.l.b16 %v479
        %v548 = vunpack.c.l.b16 %v480
        %v549 = vunpack.c.l.b16 %v481
        %v550 = vunpack.c.l.b16 %v482
        %v551 = vunpack.c.l.b16 %v483
        %v552 = vunpack.c.l.b16 %v484
        %v553 = vunpack.c.l.b16 %v485
        %v554 = vunpack.c.l.b16 %v486
        %v555 = vunpack.c.l.b16 %v487
        %v556 = vunpack.c.l.b16 %v488
        %v557 = vunpack.c.l.b16 %v489
        %v558 = vunpack.c.l.b16 %v490
        %v559 = vunpack.c.l.b16 %v491
        %v560 = vunpack.c.l.b16 %v492
        %v561 = vunpack.c.l.b16 %v493
        %v562 = vunpack.c.l.b16 %v494
        %v563 = vunpack.c.l.b16 %v495
        %v564 = vunpack.c.l.b16 %v496
        %v565 = vunpack.c.l.b16 %v497
        %v566 = vunpack.c.l.b16 %v498
        %v567 = vunpack.c.l.b16 %v499
        %v568 = vunpack.c.l.b16 %v500
        %v569 = vunpack.c.l.b16 %v501
        %v570 = vunpack.c.l.b16 %v502
        %v571 = vunpack.c.l.b16 %v503
        %v572 = vunpack.c.l.b16 %v504
        %v573 = vunpack.c.l.b16 %v505
        %v574 = vunpack.c.l.b16 %v506
        %v575 = vunpack.c.l.b16 %v507
        %v576 = vunpack.c.l.b16 %v508
        %v577 = vunpack.c.l.b16 %v509
        %v578 = vpack.c.b16 %v547, %v546
        %v579 = vpack.c.b16 %v549, %v548
        %v580 = vpack.c.b16 %v551, %v550
        %v581 = vpack.c.b16 %v553, %v552
        %v582 = vpack.c.b16 %v555, %v554
        %v583 = vpack.c.b16 %v557, %v556
        %v584 = vpack.c.b16 %v559, %v558
        %v585 = vpack.c.b16 %v561, %v560
        %v586 = vpack.c.b16 %v563, %v562
        %v587 = vpack.c.b16 %v565, %v564
        %v588 = vpack.c.b16 %v567, %v566
        %v589 = vpack.c.b16 %v569, %v568
        %v590 = vpack.c.b16 %v571, %v570
        %v591 = vpack.c.b16 %v573, %v572
        %v592 = vpack.c.b16 %v575, %v574
        %v593 = vpack.c.b16 %v577, %v576
        %610 = vmatpush.bf16.msra.mxu0 %v585
        %611 = vmatpush.bf16.msra.mxu0 %v584
        %612 = vmatpush.bf16.msra.mxu0 %v583
        %613 = vmatpush.bf16.msra.mxu0 %v582
        %614 = vmatpush.bf16.msra.mxu0 %v581
        %615 = vmatpush.bf16.msra.mxu0 %v580
        %616 = vmatpush.bf16.msra.mxu0 %v579
        %617 = vmatpush.bf16.msra.mxu0 %v578
        %618 = vmatmul.bf16.gmra.mxu0 %v462
        %v619 = vpop.f32.mrf.mxu0
        %v620 = vadd.f32 %v512, %v619
        %v621 = vpop.f32.mrf.mxu0
        %v622 = vadd.f32 %v512, %v621
        %623 = vmatmul.bf16.gmra.mxu0 %v464
        %v624 = vpop.f32.mrf.mxu0
        %v625 = vadd.f32 %v512, %v624
        %v626 = vpop.f32.mrf.mxu0
        %v627 = vadd.f32 %v512, %v626
        %628 = vmatmul.bf16.gmra.mxu0 %v466
        %v629 = vpop.f32.mrf.mxu0
        %v630 = vadd.f32 %v512, %v629
        %v631 = vpop.f32.mrf.mxu0
        %v632 = vadd.f32 %v512, %v631
        %633 = vmatmul.bf16.gmra.mxu0 %v468
        %v634 = vpop.f32.mrf.mxu0
        %v635 = vadd.f32 %v512, %v634
        %v636 = vpop.f32.mrf.mxu0
        %v637 = vadd.f32 %v512, %v636
        %638 = vmatmul.bf16.gmra.mxu0 %v470
        %v639 = vpop.f32.mrf.mxu0
        %v640 = vadd.f32 %v512, %v639
        %v641 = vpop.f32.mrf.mxu0
        %v642 = vadd.f32 %v512, %v641
        %643 = vmatmul.bf16.gmra.mxu0 %v472
        %v644 = vpop.f32.mrf.mxu0
        %v645 = vadd.f32 %v512, %v644
        %v646 = vpop.f32.mrf.mxu0
        %v647 = vadd.f32 %v512, %v646
        %648 = vmatmul.bf16.gmra.mxu0 %v474
        %v649 = vpop.f32.mrf.mxu0
        %v650 = vadd.f32 %v512, %v649
        %v651 = vpop.f32.mrf.mxu0
        %v652 = vadd.f32 %v512, %v651
        %653 = vmatmul.bf16.gmra.mxu0 %v476
        %v654 = vpop.f32.mrf.mxu0
        %v655 = vadd.f32 %v512, %v654
        %v656 = vpop.f32.mrf.mxu0
        %v657 = vadd.f32 %v512, %v656
        %658 = vdwg.mxu0
        %659 = vmatpush.bf16.msra.mxu0 %v593
        %660 = vmatpush.bf16.msra.mxu0 %v592
        %661 = vmatpush.bf16.msra.mxu0 %v591
        %662 = vmatpush.bf16.msra.mxu0 %v590
        %663 = vmatpush.bf16.msra.mxu0 %v589
        %664 = vmatpush.bf16.msra.mxu0 %v588
        %665 = vmatpush.bf16.msra.mxu0 %v587
        %666 = vmatpush.bf16.msra.mxu0 %v586
        %667 = vmatmul.bf16.gmra.mxu0 %v463
        %v668 = vpop.f32.mrf.mxu0
        %v669 = vadd.f32 %v620, %v668
        %v670 = vpop.f32.mrf.mxu0
        %v671 = vadd.f32 %v622, %v670
        %672 = vmatmul.bf16.gmra.mxu0 %v465
        %v673 = vpop.f32.mrf.mxu0
        %v674 = vadd.f32 %v625, %v673
        %v675 = vpop.f32.mrf.mxu0
        %v676 = vadd.f32 %v627, %v675
        %677 = vmatmul.bf16.gmra.mxu0 %v467
        %v678 = vpop.f32.mrf.mxu0
        %v679 = vadd.f32 %v630, %v678
        %v680 = vpop.f32.mrf.mxu0
        %v681 = vadd.f32 %v632, %v680
        %682 = vmatmul.bf16.gmra.mxu0 %v469
        %v683 = vpop.f32.mrf.mxu0
        %v684 = vadd.f32 %v635, %v683
        %v685 = vpop.f32.mrf.mxu0
        %v686 = vadd.f32 %v637, %v685
        %687 = vmatmul.bf16.gmra.mxu0 %v471
        %v688 = vpop.f32.mrf.mxu0
        %v689 = vadd.f32 %v640, %v688
        %v690 = vpop.f32.mrf.mxu0
        %v691 = vadd.f32 %v642, %v690
        %692 = vmatmul.bf16.gmra.mxu0 %v473
        %v693 = vpop.f32.mrf.mxu0
        %v694 = vadd.f32 %v645, %v693
        %v695 = vpop.f32.mrf.mxu0
        %v696 = vadd.f32 %v647, %v695
        %697 = vmatmul.bf16.gmra.mxu0 %v475
        %v698 = vpop.f32.mrf.mxu0
        %v699 = vadd.f32 %v650, %v698
        %v700 = vpop.f32.mrf.mxu0
        %v701 = vadd.f32 %v652, %v700
        %702 = vmatmul.bf16.gmra.mxu0 %v477
        %v703 = vpop.f32.mrf.mxu0
        %v704 = vadd.f32 %v655, %v703
        %v705 = vpop.f32.mrf.mxu0
        %v706 = vadd.f32 %v657, %v705
        %707 = vdwg.mxu0
        %v708 = vmax.f32 %v669, 0.0
        %v709 = vmax.f32 %v671, 0.0
        %v710 = vmax.f32 %v674, 0.0
        %v711 = vmax.f32 %v676, 0.0
        %v712 = vmax.f32 %v679, 0.0
        %v713 = vmax.f32 %v681, 0.0
        %v714 = vmax.f32 %v684, 0.0
        %v715 = vmax.f32 %v686, 0.0
        %v716 = vmax.f32 %v689, 0.0
        %v717 = vmax.f32 %v691, 0.0
        %v718 = vmax.f32 %v694, 0.0
        %v719 = vmax.f32 %v696, 0.0
        %v720 = vmax.f32 %v699, 0.0
        %v721 = vmax.f32 %v701, 0.0
        %v722 = vmax.f32 %v704, 0.0
        %v723 = vmax.f32 %v706, 0.0
        %v724 = vpack.c.bf16 %v709, %v708
        %v725 = vpack.c.bf16 %v711, %v710
        %v726 = vpack.c.bf16 %v713, %v712
        %v727 = vpack.c.bf16 %v715, %v714
        %v728 = vpack.c.bf16 %v717, %v716
        %v729 = vpack.c.bf16 %v719, %v718
        %v730 = vpack.c.bf16 %v721, %v720
        %v731 = vpack.c.bf16 %v723, %v722
        %v732 = vld [vmem:[%s4] sm:$0xf]
        %v733 = vld [vmem:[%s4 + $0x4] sm:$0xf]
        %v734 = vld [vmem:[%s4 + $0x8] sm:$0xf]
        %v735 = vld [vmem:[%s4 + $0xc] sm:$0xf]
        %v736 = vld [vmem:[%s4 + $0x10] sm:$0xf]
        %v737 = vld [vmem:[%s4 + $0x14] sm:$0xf]
        %v738 = vld [vmem:[%s4 + $0x18] sm:$0xf]
        %v739 = vld [vmem:[%s4 + $0x1c] sm:$0xf]
        %v740 = vld [vmem:[%s4 + $0x20] sm:$0xf]
        %v741 = vld [vmem:[%s4 + $0x24] sm:$0xf]
        %v742 = vld [vmem:[%s4 + $0x28] sm:$0xf]
        %v743 = vld [vmem:[%s4 + $0x2c] sm:$0xf]
        %v744 = vld [vmem:[%s4 + $0x30] sm:$0xf]
        %v745 = vld [vmem:[%s4 + $0x34] sm:$0xf]
        %v746 = vld [vmem:[%s4 + $0x38] sm:$0xf]
        %v747 = vld [vmem:[%s4 + $0x3c] sm:$0xf]
        %v748 = vld [vmem:[%s5] sm:$0x1]
        %v750 = vperm.slane %v748, 0
        %v768 = vunpack.c.l.b16 %v732
        %v769 = vunpack.c.l.b16 %v733
        %v770 = vunpack.c.l.b16 %v734
        %v771 = vunpack.c.l.b16 %v735
        %v772 = vunpack.c.l.b16 %v736
        %v773 = vunpack.c.l.b16 %v737
        %v774 = vunpack.c.l.b16 %v738
        %v775 = vunpack.c.l.b16 %v739
        %v776 = vunpack.c.l.b16 %v740
        %v777 = vunpack.c.l.b16 %v741
        %v778 = vunpack.c.l.b16 %v742
        %v779 = vunpack.c.l.b16 %v743
        %v780 = vunpack.c.l.b16 %v744
        %v781 = vunpack.c.l.b16 %v745
        %v782 = vunpack.c.l.b16 %v746
        %v783 = vunpack.c.l.b16 %v747
        %v784 = vpack.c.b16 %v769, %v768
        %v785 = vpack.c.b16 %v771, %v770
        %v786 = vpack.c.b16 %v773, %v772
        %v787 = vpack.c.b16 %v775, %v774
        %v788 = vpack.c.b16 %v777, %v776
        %v789 = vpack.c.b16 %v779, %v778
        %v790 = vpack.c.b16 %v781, %v780
        %v791 = vpack.c.b16 %v783, %v782
        %800 = vmatpush.bf16.msra.mxu0 %v791
        %801 = vmatpush.bf16.msra.mxu0 %v790
        %802 = vmatpush.bf16.msra.mxu0 %v789
        %803 = vmatpush.bf16.msra.mxu0 %v788
        %804 = vmatpush.bf16.msra.mxu0 %v787
        %805 = vmatpush.bf16.msra.mxu0 %v786
        %806 = vmatpush.bf16.msra.mxu0 %v785
        %807 = vmatpush.bf16.msra.mxu0 %v784
        %808 = vmatmul.bf16.gmra.mxu0 %v724
        %v809 = vpop.f32.mrf.mxu0
        %v810 = vadd.f32 %v750, %v809
        %v811 = vpop.f32.mrf.mxu0
        %v812 = vadd.f32 %v750, %v811
        %813 = vmatmul.bf16.gmra.mxu0 %v725
        %v814 = vpop.f32.mrf.mxu0
        %v815 = vadd.f32 %v750, %v814
        %v816 = vpop.f32.mrf.mxu0
        %v817 = vadd.f32 %v750, %v816
        %818 = vmatmul.bf16.gmra.mxu0 %v726
        %v819 = vpop.f32.mrf.mxu0
        %v820 = vadd.f32 %v750, %v819
        %v821 = vpop.f32.mrf.mxu0
        %v822 = vadd.f32 %v750, %v821
        %823 = vmatmul.bf16.gmra.mxu0 %v727
        %v824 = vpop.f32.mrf.mxu0
        %v825 = vadd.f32 %v750, %v824
        %v826 = vpop.f32.mrf.mxu0
        %v827 = vadd.f32 %v750, %v826
        %828 = vmatmul.bf16.gmra.mxu0 %v728
        %v829 = vpop.f32.mrf.mxu0
        %v830 = vadd.f32 %v750, %v829
        %v831 = vpop.f32.mrf.mxu0
        %v832 = vadd.f32 %v750, %v831
        %833 = vmatmul.bf16.gmra.mxu0 %v729
        %v834 = vpop.f32.mrf.mxu0
        %v835 = vadd.f32 %v750, %v834
        %v836 = vpop.f32.mrf.mxu0
        %v837 = vadd.f32 %v750, %v836
        %838 = vmatmul.bf16.gmra.mxu0 %v730
        %v839 = vpop.f32.mrf.mxu0
        %v840 = vadd.f32 %v750, %v839
        %v841 = vpop.f32.mrf.mxu0
        %v842 = vadd.f32 %v750, %v841
        %843 = vmatmul.bf16.gmra.mxu0 %v731
        %v844 = vpop.f32.mrf.mxu0
        %v845 = vadd.f32 %v750, %v844
        %v846 = vpop.f32.mrf.mxu0
        %v847 = vadd.f32 %v750, %v846
        %848 = vdwg.mxu0
        %v849 = vmul.f32 %v810, 0.5
        %v850 = vmul.f32 %v812, 0.5
        %v851 = vmul.f32 %v815, 0.5
        %v852 = vmul.f32 %v817, 0.5
        %v853 = vmul.f32 %v820, 0.5
        %v854 = vmul.f32 %v822, 0.5
        %v855 = vmul.f32 %v825, 0.5
        %v856 = vmul.f32 %v827, 0.5
        %v857 = vmul.f32 %v830, 0.5
        %v858 = vmul.f32 %v832, 0.5
        %v859 = vmul.f32 %v835, 0.5
        %v860 = vmul.f32 %v837, 0.5
        %v861 = vmul.f32 %v840, 0.5
        %v862 = vmul.f32 %v842, 0.5
        %v863 = vmul.f32 %v845, 0.5
        %v864 = vmul.f32 %v847, 0.5
        %v865 = vmul.f32 %v849, 1.442695
        %v866 = vpow.pop %v865
        %v867 = vmul.f32 %v850, 1.442695
        %v868 = vpow.pop %v867
        %v869 = vmul.f32 %v851, 1.442695
        %v870 = vpow.pop %v869
        %v871 = vmul.f32 %v852, 1.442695
        %v872 = vpow.pop %v871
        %v873 = vmul.f32 %v853, 1.442695
        %v874 = vpow.pop %v873
        %v875 = vmul.f32 %v854, 1.442695
        %v876 = vpow.pop %v875
        %v877 = vmul.f32 %v855, 1.442695
        %v878 = vpow.pop %v877
        %v879 = vmul.f32 %v856, 1.442695
        %v880 = vpow.pop %v879
        %v881 = vmul.f32 %v857, 1.442695
        %v882 = vpow.pop %v881
        %v883 = vmul.f32 %v858, 1.442695
        %v884 = vpow.pop %v883
        %v885 = vmul.f32 %v859, 1.442695
        %v886 = vpow.pop %v885
        %v887 = vmul.f32 %v860, 1.442695
        %v888 = vpow.pop %v887
        %v889 = vmul.f32 %v861, 1.442695
        %v890 = vpow.pop %v889
        %v891 = vmul.f32 %v862, 1.442695
        %v892 = vpow.pop %v891
        %v893 = vmul.f32 %v863, 1.442695
        %v894 = vpow.pop %v893
        %v895 = vmul.f32 %v864, 1.442695
        %v896 = vpow.pop %v895
        %913 = vrot.lane.b32.xlu0 %v446, 64
        %v914 = vpop.permute.xlu0 %913
        %915 = vrot.lane.b32.xlu0 %v447, 64
        %v916 = vpop.permute.xlu0 %915
        %917 = vrot.lane.b32.xlu0 %v448, 64
        %v918 = vpop.permute.xlu0 %917
        %919 = vrot.lane.b32.xlu0 %v449, 64
        %v920 = vpop.permute.xlu0 %919
        %921 = vrot.lane.b32.xlu0 %v450, 64
        %v922 = vpop.permute.xlu0 %921
        %923 = vrot.lane.b32.xlu0 %v451, 64
        %v924 = vpop.permute.xlu0 %923
        %925 = vrot.lane.b32.xlu0 %v452, 64
        %v926 = vpop.permute.xlu0 %925
        %927 = vrot.lane.b32.xlu0 %v453, 64
        %v928 = vpop.permute.xlu0 %927
        %929 = vrot.lane.b32.xlu0 %v454, 64
        %v930 = vpop.permute.xlu0 %929
        %931 = vrot.lane.b32.xlu0 %v455, 64
        %v932 = vpop.permute.xlu0 %931
        %933 = vrot.lane.b32.xlu0 %v456, 64
        %v934 = vpop.permute.xlu0 %933
        %935 = vrot.lane.b32.xlu0 %v457, 64
        %v936 = vpop.permute.xlu0 %935
        %937 = vrot.lane.b32.xlu0 %v458, 64
        %v938 = vpop.permute.xlu0 %937
        %939 = vrot.lane.b32.xlu0 %v459, 64
        %v940 = vpop.permute.xlu0 %939
        %941 = vrot.lane.b32.xlu0 %v460, 64
        %v942 = vpop.permute.xlu0 %941
        %943 = vrot.lane.b32.xlu0 %v461, 64
        %v944 = vpop.permute.xlu0 %943
        %v961 = vmul.f32 %v866, %v914
        %v962 = vmul.f32 %v868, %v916
        %v963 = vmul.f32 %v870, %v918
        %v964 = vmul.f32 %v872, %v920
        %v965 = vmul.f32 %v874, %v922
        %v966 = vmul.f32 %v876, %v924
        %v967 = vmul.f32 %v878, %v926
        %v968 = vmul.f32 %v880, %v928
        %v969 = vmul.f32 %v882, %v930
        %v970 = vmul.f32 %v884, %v932
        %v971 = vmul.f32 %v886, %v934
        %v972 = vmul.f32 %v888, %v936
        %v973 = vmul.f32 %v890, %v938
        %v974 = vmul.f32 %v892, %v940
        %v975 = vmul.f32 %v894, %v942
        %v976 = vmul.f32 %v896, %v944
        %993 = vrot.lane.b32.xlu0 %v961, 64
        %v994 = vpop.permute.xlu0 %993
        %995 = vrot.lane.b32.xlu0 %v962, 64
        %v996 = vpop.permute.xlu0 %995
        %997 = vrot.lane.b32.xlu0 %v963, 64
        %v998 = vpop.permute.xlu0 %997
        %999 = vrot.lane.b32.xlu0 %v964, 64
        %v1000 = vpop.permute.xlu0 %999
        %1001 = vrot.lane.b32.xlu0 %v965, 64
        %v1002 = vpop.permute.xlu0 %1001
        %1003 = vrot.lane.b32.xlu0 %v966, 64
        %v1004 = vpop.permute.xlu0 %1003
        %1005 = vrot.lane.b32.xlu0 %v967, 64
        %v1006 = vpop.permute.xlu0 %1005
        %1007 = vrot.lane.b32.xlu0 %v968, 64
        %v1008 = vpop.permute.xlu0 %1007
        %1009 = vrot.lane.b32.xlu0 %v969, 64
        %v1010 = vpop.permute.xlu0 %1009
        %1011 = vrot.lane.b32.xlu0 %v970, 64
        %v1012 = vpop.permute.xlu0 %1011
        %1013 = vrot.lane.b32.xlu0 %v971, 64
        %v1014 = vpop.permute.xlu0 %1013
        %1015 = vrot.lane.b32.xlu0 %v972, 64
        %v1016 = vpop.permute.xlu0 %1015
        %1017 = vrot.lane.b32.xlu0 %v973, 64
        %v1018 = vpop.permute.xlu0 %1017
        %1019 = vrot.lane.b32.xlu0 %v974, 64
        %v1020 = vpop.permute.xlu0 %1019
        %1021 = vrot.lane.b32.xlu0 %v975, 64
        %v1022 = vpop.permute.xlu0 %1021
        %1023 = vrot.lane.b32.xlu0 %v976, 64
        %v1024 = vpop.permute.xlu0 %1023
        %v1041 = vadd.f32 %v810, %v994
        %v1042 = vadd.f32 %v812, %v996
        %v1043 = vadd.f32 %v815, %v998
        %v1044 = vadd.f32 %v817, %v1000
        %v1045 = vadd.f32 %v820, %v1002
        %v1046 = vadd.f32 %v822, %v1004
        %v1047 = vadd.f32 %v825, %v1006
        %v1048 = vadd.f32 %v827, %v1008
        %v1049 = vadd.f32 %v830, %v1010
        %v1050 = vadd.f32 %v832, %v1012
        %v1051 = vadd.f32 %v835, %v1014
        %v1052 = vadd.f32 %v837, %v1016
        %v1053 = vadd.f32 %v840, %v1018
        %v1054 = vadd.f32 %v842, %v1020
        %v1055 = vadd.f32 %v845, %v1022
        %v1056 = vadd.f32 %v847, %v1024
        %v1057 = vmul.f32 %v446, %v446
        %v1058 = vmul.f32 %v447, %v447
        %v1059 = vmul.f32 %v448, %v448
        %v1060 = vmul.f32 %v449, %v449
        %v1061 = vmul.f32 %v450, %v450
        %v1062 = vmul.f32 %v451, %v451
        %v1063 = vmul.f32 %v452, %v452
        %v1064 = vmul.f32 %v453, %v453
        %v1065 = vmul.f32 %v454, %v454
        %v1066 = vmul.f32 %v455, %v455
        %v1067 = vmul.f32 %v456, %v456
        %v1068 = vmul.f32 %v457, %v457
        %v1069 = vmul.f32 %v458, %v458
        %v1070 = vmul.f32 %v459, %v459
        %v1071 = vmul.f32 %v460, %v460
        %v1072 = vmul.f32 %v461, %v461
        %1089 = vrot.lane.b32.xlu0 %v1057, 64
        %v1090 = vpop.permute.xlu0 %1089
        %1091 = vrot.lane.b32.xlu0 %v1058, 64
        %v1092 = vpop.permute.xlu0 %1091
        %1093 = vrot.lane.b32.xlu0 %v1059, 64
        %v1094 = vpop.permute.xlu0 %1093
        %1095 = vrot.lane.b32.xlu0 %v1060, 64
        %v1096 = vpop.permute.xlu0 %1095
        %1097 = vrot.lane.b32.xlu0 %v1061, 64
        %v1098 = vpop.permute.xlu0 %1097
        %1099 = vrot.lane.b32.xlu0 %v1062, 64
        %v1100 = vpop.permute.xlu0 %1099
        %1101 = vrot.lane.b32.xlu0 %v1063, 64
        %v1102 = vpop.permute.xlu0 %1101
        %1103 = vrot.lane.b32.xlu0 %v1064, 64
        %v1104 = vpop.permute.xlu0 %1103
        %1105 = vrot.lane.b32.xlu0 %v1065, 64
        %v1106 = vpop.permute.xlu0 %1105
        %1107 = vrot.lane.b32.xlu0 %v1066, 64
        %v1108 = vpop.permute.xlu0 %1107
        %1109 = vrot.lane.b32.xlu0 %v1067, 64
        %v1110 = vpop.permute.xlu0 %1109
        %1111 = vrot.lane.b32.xlu0 %v1068, 64
        %v1112 = vpop.permute.xlu0 %1111
        %1113 = vrot.lane.b32.xlu0 %v1069, 64
        %v1114 = vpop.permute.xlu0 %1113
        %1115 = vrot.lane.b32.xlu0 %v1070, 64
        %v1116 = vpop.permute.xlu0 %1115
        %1117 = vrot.lane.b32.xlu0 %v1071, 64
        %v1118 = vpop.permute.xlu0 %1117
        %1119 = vrot.lane.b32.xlu0 %v1072, 64
        %v1120 = vpop.permute.xlu0 %1119
        %v1137 = vadd.f32 %v810, %v1090
        %v1138 = vadd.f32 %v812, %v1092
        %v1139 = vadd.f32 %v815, %v1094
        %v1140 = vadd.f32 %v817, %v1096
        %v1141 = vadd.f32 %v820, %v1098
        %v1142 = vadd.f32 %v822, %v1100
        %v1143 = vadd.f32 %v825, %v1102
        %v1144 = vadd.f32 %v827, %v1104
        %v1145 = vadd.f32 %v830, %v1106
        %v1146 = vadd.f32 %v832, %v1108
        %v1147 = vadd.f32 %v835, %v1110
        %v1148 = vadd.f32 %v837, %v1112
        %v1149 = vadd.f32 %v840, %v1114
        %v1150 = vadd.f32 %v842, %v1116
        %v1151 = vadd.f32 %v845, %v1118
        %v1152 = vadd.f32 %v847, %v1120
        %v1153 = vmul.f32 %v1041, %v1041
        %v1154 = vmul.f32 %v1042, %v1042
        %v1155 = vmul.f32 %v1043, %v1043
        %v1156 = vmul.f32 %v1044, %v1044
        %v1157 = vmul.f32 %v1045, %v1045
        %v1158 = vmul.f32 %v1046, %v1046
        %v1159 = vmul.f32 %v1047, %v1047
        %v1160 = vmul.f32 %v1048, %v1048
        %v1161 = vmul.f32 %v1049, %v1049
        %v1162 = vmul.f32 %v1050, %v1050
        %v1163 = vmul.f32 %v1051, %v1051
        %v1164 = vmul.f32 %v1052, %v1052
        %v1165 = vmul.f32 %v1053, %v1053
        %v1166 = vmul.f32 %v1054, %v1054
        %v1167 = vmul.f32 %v1055, %v1055
        %v1168 = vmul.f32 %v1056, %v1056
        %1185 = vrot.lane.b32.xlu0 %v1153, 64
        %v1186 = vpop.permute.xlu0 %1185
        %1187 = vrot.lane.b32.xlu0 %v1154, 64
        %v1188 = vpop.permute.xlu0 %1187
        %1189 = vrot.lane.b32.xlu0 %v1155, 64
        %v1190 = vpop.permute.xlu0 %1189
        %1191 = vrot.lane.b32.xlu0 %v1156, 64
        %v1192 = vpop.permute.xlu0 %1191
        %1193 = vrot.lane.b32.xlu0 %v1157, 64
        %v1194 = vpop.permute.xlu0 %1193
        %1195 = vrot.lane.b32.xlu0 %v1158, 64
        %v1196 = vpop.permute.xlu0 %1195
        %1197 = vrot.lane.b32.xlu0 %v1159, 64
        %v1198 = vpop.permute.xlu0 %1197
        %1199 = vrot.lane.b32.xlu0 %v1160, 64
        %v1200 = vpop.permute.xlu0 %1199
        %1201 = vrot.lane.b32.xlu0 %v1161, 64
        %v1202 = vpop.permute.xlu0 %1201
        %1203 = vrot.lane.b32.xlu0 %v1162, 64
        %v1204 = vpop.permute.xlu0 %1203
        %1205 = vrot.lane.b32.xlu0 %v1163, 64
        %v1206 = vpop.permute.xlu0 %1205
        %1207 = vrot.lane.b32.xlu0 %v1164, 64
        %v1208 = vpop.permute.xlu0 %1207
        %1209 = vrot.lane.b32.xlu0 %v1165, 64
        %v1210 = vpop.permute.xlu0 %1209
        %1211 = vrot.lane.b32.xlu0 %v1166, 64
        %v1212 = vpop.permute.xlu0 %1211
        %1213 = vrot.lane.b32.xlu0 %v1167, 64
        %v1214 = vpop.permute.xlu0 %1213
        %1215 = vrot.lane.b32.xlu0 %v1168, 64
        %v1216 = vpop.permute.xlu0 %1215
        %v1233 = vsub.f32 %v1137, %v1186
        %v1234 = vsub.f32 %v1138, %v1188
        %v1235 = vsub.f32 %v1139, %v1190
        %v1236 = vsub.f32 %v1140, %v1192
        %v1237 = vsub.f32 %v1141, %v1194
        %v1238 = vsub.f32 %v1142, %v1196
        %v1239 = vsub.f32 %v1143, %v1198
        %v1240 = vsub.f32 %v1144, %v1200
        %v1241 = vsub.f32 %v1145, %v1202
        %v1242 = vsub.f32 %v1146, %v1204
        %v1243 = vsub.f32 %v1147, %v1206
        %v1244 = vsub.f32 %v1148, %v1208
        %v1245 = vsub.f32 %v1149, %v1210
        %v1246 = vsub.f32 %v1150, %v1212
        %v1247 = vsub.f32 %v1151, %v1214
        %v1248 = vsub.f32 %v1152, %v1216
        %1265 = vrot.lane.b32.xlu0 %v1233, 64
        %v1266 = vpop.permute.xlu0 %1265
        %1267 = vrot.lane.b32.xlu0 %v1234, 64
        %v1268 = vpop.permute.xlu0 %1267
        %1269 = vrot.lane.b32.xlu0 %v1235, 64
        %v1270 = vpop.permute.xlu0 %1269
        %1271 = vrot.lane.b32.xlu0 %v1236, 64
        %v1272 = vpop.permute.xlu0 %1271
        %1273 = vrot.lane.b32.xlu0 %v1237, 64
        %v1274 = vpop.permute.xlu0 %1273
        %1275 = vrot.lane.b32.xlu0 %v1238, 64
        %v1276 = vpop.permute.xlu0 %1275
        %1277 = vrot.lane.b32.xlu0 %v1239, 64
        %v1278 = vpop.permute.xlu0 %1277
        %1279 = vrot.lane.b32.xlu0 %v1240, 64
        %v1280 = vpop.permute.xlu0 %1279
        %1281 = vrot.lane.b32.xlu0 %v1241, 64
        %v1282 = vpop.permute.xlu0 %1281
        %1283 = vrot.lane.b32.xlu0 %v1242, 64
        %v1284 = vpop.permute.xlu0 %1283
        %1285 = vrot.lane.b32.xlu0 %v1243, 64
        %v1286 = vpop.permute.xlu0 %1285
        %1287 = vrot.lane.b32.xlu0 %v1244, 64
        %v1288 = vpop.permute.xlu0 %1287
        %1289 = vrot.lane.b32.xlu0 %v1245, 64
        %v1290 = vpop.permute.xlu0 %1289
        %1291 = vrot.lane.b32.xlu0 %v1246, 64
        %v1292 = vpop.permute.xlu0 %1291
        %1293 = vrot.lane.b32.xlu0 %v1247, 64
        %v1294 = vpop.permute.xlu0 %1293
        %1295 = vrot.lane.b32.xlu0 %v1248, 64
        %v1296 = vpop.permute.xlu0 %1295
        %vm1313 = vcmask 523264
        %v1314 = vsel %vm1313, %v1266, 0.0
        %1315 = vadd.xlane.f32.xlu0 %v1314
        %v1316 = vpop.xlane.xlu0 %1315
        %v1317 = vsel %vm1313, %v1268, 0.0
        %1318 = vadd.xlane.f32.xlu0 %v1317
        %v1319 = vpop.xlane.xlu0 %1318
        %v1320 = vsel %vm1313, %v1270, 0.0
        %1321 = vadd.xlane.f32.xlu0 %v1320
        %v1322 = vpop.xlane.xlu0 %1321
        %v1323 = vsel %vm1313, %v1272, 0.0
        %1324 = vadd.xlane.f32.xlu0 %v1323
        %v1325 = vpop.xlane.xlu0 %1324
        %v1326 = vsel %vm1313, %v1274, 0.0
        %1327 = vadd.xlane.f32.xlu0 %v1326
        %v1328 = vpop.xlane.xlu0 %1327
        %v1329 = vsel %vm1313, %v1276, 0.0
        %1330 = vadd.xlane.f32.xlu0 %v1329
        %v1331 = vpop.xlane.xlu0 %1330
        %v1332 = vsel %vm1313, %v1278, 0.0
        %1333 = vadd.xlane.f32.xlu0 %v1332
        %v1334 = vpop.xlane.xlu0 %1333
        %v1335 = vsel %vm1313, %v1280, 0.0
        %1336 = vadd.xlane.f32.xlu0 %v1335
        %v1337 = vpop.xlane.xlu0 %1336
        %v1338 = vsel %vm1313, %v1282, 0.0
        %1339 = vadd.xlane.f32.xlu0 %v1338
        %v1340 = vpop.xlane.xlu0 %1339
        %v1341 = vsel %vm1313, %v1284, 0.0
        %1342 = vadd.xlane.f32.xlu0 %v1341
        %v1343 = vpop.xlane.xlu0 %1342
        %v1344 = vsel %vm1313, %v1286, 0.0
        %1345 = vadd.xlane.f32.xlu0 %v1344
        %v1346 = vpop.xlane.xlu0 %1345
        %v1347 = vsel %vm1313, %v1288, 0.0
        %1348 = vadd.xlane.f32.xlu0 %v1347
        %v1349 = vpop.xlane.xlu0 %1348
        %v1350 = vsel %vm1313, %v1290, 0.0
        %1351 = vadd.xlane.f32.xlu0 %v1350
        %v1352 = vpop.xlane.xlu0 %1351
        %v1353 = vsel %vm1313, %v1292, 0.0
        %1354 = vadd.xlane.f32.xlu0 %v1353
        %v1355 = vpop.xlane.xlu0 %1354
        %v1356 = vsel %vm1313, %v1294, 0.0
        %1357 = vadd.xlane.f32.xlu0 %v1356
        %v1358 = vpop.xlane.xlu0 %1357
        %v1359 = vsel %vm1313, %v1296, 0.0
        %1360 = vadd.xlane.f32.xlu0 %v1359
        %v1361 = vpop.xlane.xlu0 %1360
        %v1362 = vmul.f32 %v1316, -0.5
        %v1363 = vmul.f32 %v1319, -0.5
        %v1364 = vmul.f32 %v1322, -0.5
        %v1365 = vmul.f32 %v1325, -0.5
        %v1366 = vmul.f32 %v1328, -0.5
        %v1367 = vmul.f32 %v1331, -0.5
        %v1368 = vmul.f32 %v1334, -0.5
        %v1369 = vmul.f32 %v1337, -0.5
        %v1370 = vmul.f32 %v1340, -0.5
        %v1371 = vmul.f32 %v1343, -0.5
        %v1372 = vmul.f32 %v1346, -0.5
        %v1373 = vmul.f32 %v1349, -0.5
        %v1374 = vmul.f32 %v1352, -0.5
        %v1375 = vmul.f32 %v1355, -0.5
        %v1376 = vmul.f32 %v1358, -0.5
        %v1377 = vmul.f32 %v1361, -0.5
        %v1378 = vpack.c.bf16 %v1042, %v1041
        %v1379 = vpack.c.bf16 %v1044, %v1043
        %v1380 = vpack.c.bf16 %v1046, %v1045
        %v1381 = vpack.c.bf16 %v1048, %v1047
        %v1382 = vpack.c.bf16 %v1050, %v1049
        %v1383 = vpack.c.bf16 %v1052, %v1051
        %v1384 = vpack.c.bf16 %v1054, %v1053
        %v1385 = vpack.c.bf16 %v1056, %v1055
        %v1386 = vld [vmem:[%s6] sm:$0xf]
        %v1387 = vld [vmem:[%s6 + $0x4] sm:$0xf]
        %v1388 = vld [vmem:[%s6 + $0x8] sm:$0xf]
        %v1389 = vld [vmem:[%s6 + $0xc] sm:$0xf]
        %v1390 = vld [vmem:[%s6 + $0x10] sm:$0xf]
        %v1391 = vld [vmem:[%s6 + $0x14] sm:$0xf]
        %v1392 = vld [vmem:[%s6 + $0x18] sm:$0xf]
        %v1393 = vld [vmem:[%s6 + $0x1c] sm:$0xf]
        %v1394 = vld [vmem:[%s7] sm:$0x1]
        %v1396 = vperm.slane %v1394, 0
        %v1406 = vunpack.c.l.b16 %v1386
        %v1407 = vunpack.c.l.b16 %v1387
        %v1408 = vunpack.c.l.b16 %v1388
        %v1409 = vunpack.c.l.b16 %v1389
        %v1410 = vunpack.c.l.b16 %v1390
        %v1411 = vunpack.c.l.b16 %v1391
        %v1412 = vunpack.c.l.b16 %v1392
        %v1413 = vunpack.c.l.b16 %v1393
        %v1414 = vpack.c.b16 %v1407, %v1406
        %v1415 = vpack.c.b16 %v1409, %v1408
        %v1416 = vpack.c.b16 %v1411, %v1410
        %v1417 = vpack.c.b16 %v1413, %v1412
        %v1423 = vsel %vm1313, %v1378, 0
        %v1426 = vsel %vm1313, %v1379, 0
        %v1429 = vsel %vm1313, %v1380, 0
        %v1432 = vsel %vm1313, %v1381, 0
        %v1435 = vsel %vm1313, %v1382, 0
        %v1438 = vsel %vm1313, %v1383, 0
        %v1441 = vsel %vm1313, %v1384, 0
        %v1444 = vsel %vm1313, %v1385, 0
        %1446 = vmatpush.bf16.msra.mxu0 0
        %1447 = vmatpush.bf16.msra.mxu0 0
        %1448 = vmatpush.bf16.msra.mxu0 0
        %1449 = vmatpush.bf16.msra.mxu0 0
        %1450 = vmatpush.bf16.msra.mxu0 %v1417
        %1451 = vmatpush.bf16.msra.mxu0 %v1416
        %1452 = vmatpush.bf16.msra.mxu0 %v1415
        %1453 = vmatpush.bf16.msra.mxu0 %v1414
        %1454 = vmatmul.bf16.gmra.mxu0 %v1423
        %v1455 = vpop.f32.mrf.mxu0
        %v1456 = vadd.f32 %v1396, %v1455
        %v1457 = vpop.f32.mrf.mxu0
        %v1458 = vadd.f32 %v1396, %v1457
        %1459 = vmatmul.bf16.gmra.mxu0 %v1426
        %v1460 = vpop.f32.mrf.mxu0
        %v1461 = vadd.f32 %v1396, %v1460
        %v1462 = vpop.f32.mrf.mxu0
        %v1463 = vadd.f32 %v1396, %v1462
        %1464 = vmatmul.bf16.gmra.mxu0 %v1429
        %v1465 = vpop.f32.mrf.mxu0
        %v1466 = vadd.f32 %v1396, %v1465
        %v1467 = vpop.f32.mrf.mxu0
        %v1468 = vadd.f32 %v1396, %v1467
        %1469 = vmatmul.bf16.gmra.mxu0 %v1432
        %v1470 = vpop.f32.mrf.mxu0
        %v1471 = vadd.f32 %v1396, %v1470
        %v1472 = vpop.f32.mrf.mxu0
        %v1473 = vadd.f32 %v1396, %v1472
        %1474 = vmatmul.bf16.gmra.mxu0 %v1435
        %v1475 = vpop.f32.mrf.mxu0
        %v1476 = vadd.f32 %v1396, %v1475
        %v1477 = vpop.f32.mrf.mxu0
        %v1478 = vadd.f32 %v1396, %v1477
        %1479 = vmatmul.bf16.gmra.mxu0 %v1438
        %v1480 = vpop.f32.mrf.mxu0
        %v1481 = vadd.f32 %v1396, %v1480
        %v1482 = vpop.f32.mrf.mxu0
        %v1483 = vadd.f32 %v1396, %v1482
        %1484 = vmatmul.bf16.gmra.mxu0 %v1441
        %v1485 = vpop.f32.mrf.mxu0
        %v1486 = vadd.f32 %v1396, %v1485
        %v1487 = vpop.f32.mrf.mxu0
        %v1488 = vadd.f32 %v1396, %v1487
        %1489 = vmatmul.bf16.gmra.mxu0 %v1444
        %v1490 = vpop.f32.mrf.mxu0
        %v1491 = vadd.f32 %v1396, %v1490
        %v1492 = vpop.f32.mrf.mxu0
        %v1493 = vadd.f32 %v1396, %v1492
        %1494 = vdwg.mxu0
        %v1495 = vmax.f32 %v1456, 0.0
        %v1496 = vmax.f32 %v1458, 0.0
        %v1497 = vmax.f32 %v1461, 0.0
        %v1498 = vmax.f32 %v1463, 0.0
        %v1499 = vmax.f32 %v1466, 0.0
        %v1500 = vmax.f32 %v1468, 0.0
        %v1501 = vmax.f32 %v1471, 0.0
        %v1502 = vmax.f32 %v1473, 0.0
        %v1503 = vmax.f32 %v1476, 0.0
        %v1504 = vmax.f32 %v1478, 0.0
        %v1505 = vmax.f32 %v1481, 0.0
        %v1506 = vmax.f32 %v1483, 0.0
        %v1507 = vmax.f32 %v1486, 0.0
        %v1508 = vmax.f32 %v1488, 0.0
        %v1509 = vmax.f32 %v1491, 0.0
        %v1510 = vmax.f32 %v1493, 0.0
        %v1511 = vpack.c.bf16 %v1496, %v1495
        %v1512 = vpack.c.bf16 %v1498, %v1497
        %v1513 = vpack.c.bf16 %v1500, %v1499
        %v1514 = vpack.c.bf16 %v1502, %v1501
        %v1515 = vpack.c.bf16 %v1504, %v1503
        %v1516 = vpack.c.bf16 %v1506, %v1505
        %v1517 = vpack.c.bf16 %v1508, %v1507
        %v1518 = vpack.c.bf16 %v1510, %v1509
        %v1519 = vld [vmem:[%s8] sm:$0xff]
        %v1520 = vld [vmem:[%s8 + $0x8] sm:$0xff]
        %v1521 = vld [vmem:[%s8 + $0x10] sm:$0xff]
        %v1522 = vld [vmem:[%s8 + $0x18] sm:$0xff]
        %v1523 = vld [vmem:[%s8 + $0x20] sm:$0xff]
        %v1524 = vld [vmem:[%s8 + $0x28] sm:$0xff]
        %v1525 = vld [vmem:[%s8 + $0x30] sm:$0xff]
        %v1526 = vld [vmem:[%s8 + $0x38] sm:$0xff]
        %v1527 = vld [vmem:[%s8 + $0x40] sm:$0xff]
        %v1528 = vld [vmem:[%s8 + $0x48] sm:$0xff]
        %v1529 = vld [vmem:[%s8 + $0x50] sm:$0xff]
        %v1530 = vld [vmem:[%s8 + $0x58] sm:$0xff]
        %v1531 = vld [vmem:[%s8 + $0x60] sm:$0xff]
        %v1532 = vld [vmem:[%s8 + $0x68] sm:$0xff]
        %v1533 = vld [vmem:[%s8 + $0x70] sm:$0xff]
        %v1534 = vld [vmem:[%s8 + $0x78] sm:$0xff]
        %v1535 = vld [vmem:[%s9] sm:$0x3]
        %v1537 = vperm.slane %v1535, 0
        %v1538 = vperm.slane %v1535, 1
        %v1557 = vunpack.c.l.b16 %v1519
        %v1558 = vunpack.c.h.b16 %v1519
        %v1559 = vunpack.c.l.b16 %v1520
        %v1560 = vunpack.c.h.b16 %v1520
        %v1561 = vunpack.c.l.b16 %v1521
        %v1562 = vunpack.c.h.b16 %v1521
        %v1563 = vunpack.c.l.b16 %v1522
        %v1564 = vunpack.c.h.b16 %v1522
        %v1565 = vunpack.c.l.b16 %v1523
        %v1566 = vunpack.c.h.b16 %v1523
        %v1567 = vunpack.c.l.b16 %v1524
        %v1568 = vunpack.c.h.b16 %v1524
        %v1569 = vunpack.c.l.b16 %v1525
        %v1570 = vunpack.c.h.b16 %v1525
        %v1571 = vunpack.c.l.b16 %v1526
        %v1572 = vunpack.c.h.b16 %v1526
        %v1573 = vunpack.c.l.b16 %v1527
        %v1574 = vunpack.c.h.b16 %v1527
        %v1575 = vunpack.c.l.b16 %v1528
        %v1576 = vunpack.c.h.b16 %v1528
        %v1577 = vunpack.c.l.b16 %v1529
        %v1578 = vunpack.c.h.b16 %v1529
        %v1579 = vunpack.c.l.b16 %v1530
        %v1580 = vunpack.c.h.b16 %v1530
        %v1581 = vunpack.c.l.b16 %v1531
        %v1582 = vunpack.c.h.b16 %v1531
        %v1583 = vunpack.c.l.b16 %v1532
        %v1584 = vunpack.c.h.b16 %v1532
        %v1585 = vunpack.c.l.b16 %v1533
        %v1586 = vunpack.c.h.b16 %v1533
        %v1587 = vunpack.c.l.b16 %v1534
        %v1588 = vunpack.c.h.b16 %v1534
        %v1589 = vpack.c.b16 %v1559, %v1557
        %v1590 = vpack.c.b16 %v1560, %v1558
        %v1591 = vpack.c.b16 %v1563, %v1561
        %v1592 = vpack.c.b16 %v1564, %v1562
        %v1593 = vpack.c.b16 %v1567, %v1565
        %v1594 = vpack.c.b16 %v1568, %v1566
        %v1595 = vpack.c.b16 %v1571, %v1569
        %v1596 = vpack.c.b16 %v1572, %v1570
        %v1597 = vpack.c.b16 %v1575, %v1573
        %v1598 = vpack.c.b16 %v1576, %v1574
        %v1599 = vpack.c.b16 %v1579, %v1577
        %v1600 = vpack.c.b16 %v1580, %v1578
        %v1601 = vpack.c.b16 %v1583, %v1581
        %v1602 = vpack.c.b16 %v1584, %v1582
        %v1603 = vpack.c.b16 %v1587, %v1585
        %v1604 = vpack.c.b16 %v1588, %v1586
        %1621 = vmatpush.bf16.msra.mxu0 %v1603
        %1622 = vmatpush.bf16.msra.mxu0 %v1601
        %1623 = vmatpush.bf16.msra.mxu0 %v1599
        %1624 = vmatpush.bf16.msra.mxu0 %v1597
        %1625 = vmatpush.bf16.msra.mxu0 %v1595
        %1626 = vmatpush.bf16.msra.mxu0 %v1593
        %1627 = vmatpush.bf16.msra.mxu0 %v1591
        %1628 = vmatpush.bf16.msra.mxu0 %v1589
        %1629 = vmatmul.bf16.gmra.mxu0 %v1511
        %v1630 = vpop.f32.mrf.mxu0
        %v1631 = vadd.f32 %v1537, %v1630
        %v1632 = vpop.f32.mrf.mxu0
        %v1633 = vadd.f32 %v1537, %v1632
        %1634 = vmatmul.bf16.gmra.mxu0 %v1512
        %v1635 = vpop.f32.mrf.mxu0
        %v1636 = vadd.f32 %v1537, %v1635
        %v1637 = vpop.f32.mrf.mxu0
        %v1638 = vadd.f32 %v1537, %v1637
        %1639 = vmatmul.bf16.gmra.mxu0 %v1513
        %v1640 = vpop.f32.mrf.mxu0
        %v1641 = vadd.f32 %v1537, %v1640
        %v1642 = vpop.f32.mrf.mxu0
        %v1643 = vadd.f32 %v1537, %v1642
        %1644 = vmatmul.bf16.gmra.mxu0 %v1514
        %v1645 = vpop.f32.mrf.mxu0
        %v1646 = vadd.f32 %v1537, %v1645
        %v1647 = vpop.f32.mrf.mxu0
        %v1648 = vadd.f32 %v1537, %v1647
        %1649 = vmatmul.bf16.gmra.mxu0 %v1515
        %v1650 = vpop.f32.mrf.mxu0
        %v1651 = vadd.f32 %v1537, %v1650
        %v1652 = vpop.f32.mrf.mxu0
        %v1653 = vadd.f32 %v1537, %v1652
        %1654 = vmatmul.bf16.gmra.mxu0 %v1516
        %v1655 = vpop.f32.mrf.mxu0
        %v1656 = vadd.f32 %v1537, %v1655
        %v1657 = vpop.f32.mrf.mxu0
        %v1658 = vadd.f32 %v1537, %v1657
        %1659 = vmatmul.bf16.gmra.mxu0 %v1517
        %v1660 = vpop.f32.mrf.mxu0
        %v1661 = vadd.f32 %v1537, %v1660
        %v1662 = vpop.f32.mrf.mxu0
        %v1663 = vadd.f32 %v1537, %v1662
        %1664 = vmatmul.bf16.gmra.mxu0 %v1518
        %v1665 = vpop.f32.mrf.mxu0
        %v1666 = vadd.f32 %v1537, %v1665
        %v1667 = vpop.f32.mrf.mxu0
        %v1668 = vadd.f32 %v1537, %v1667
        %1669 = vdwg.mxu0
        %1670 = vmatpush.bf16.msra.mxu0 %v1604
        %1671 = vmatpush.bf16.msra.mxu0 %v1602
        %1672 = vmatpush.bf16.msra.mxu0 %v1600
        %1673 = vmatpush.bf16.msra.mxu0 %v1598
        %1674 = vmatpush.bf16.msra.mxu0 %v1596
        %1675 = vmatpush.bf16.msra.mxu0 %v1594
        %1676 = vmatpush.bf16.msra.mxu0 %v1592
        %1677 = vmatpush.bf16.msra.mxu0 %v1590
        %1678 = vmatmul.bf16.gmra.mxu0 %v1511
        %v1679 = vpop.f32.mrf.mxu0
        %v1680 = vadd.f32 %v1538, %v1679
        %v1681 = vpop.f32.mrf.mxu0
        %v1682 = vadd.f32 %v1538, %v1681
        %1683 = vmatmul.bf16.gmra.mxu0 %v1512
        %v1684 = vpop.f32.mrf.mxu0
        %v1685 = vadd.f32 %v1538, %v1684
        %v1686 = vpop.f32.mrf.mxu0
        %v1687 = vadd.f32 %v1538, %v1686
        %1688 = vmatmul.bf16.gmra.mxu0 %v1513
        %v1689 = vpop.f32.mrf.mxu0
        %v1690 = vadd.f32 %v1538, %v1689
        %v1691 = vpop.f32.mrf.mxu0
        %v1692 = vadd.f32 %v1538, %v1691
        %1693 = vmatmul.bf16.gmra.mxu0 %v1514
        %v1694 = vpop.f32.mrf.mxu0
        %v1695 = vadd.f32 %v1538, %v1694
        %v1696 = vpop.f32.mrf.mxu0
        %v1697 = vadd.f32 %v1538, %v1696
        %1698 = vmatmul.bf16.gmra.mxu0 %v1515
        %v1699 = vpop.f32.mrf.mxu0
        %v1700 = vadd.f32 %v1538, %v1699
        %v1701 = vpop.f32.mrf.mxu0
        %v1702 = vadd.f32 %v1538, %v1701
        %1703 = vmatmul.bf16.gmra.mxu0 %v1516
        %v1704 = vpop.f32.mrf.mxu0
        %v1705 = vadd.f32 %v1538, %v1704
        %v1706 = vpop.f32.mrf.mxu0
        %v1707 = vadd.f32 %v1538, %v1706
        %1708 = vmatmul.bf16.gmra.mxu0 %v1517
        %v1709 = vpop.f32.mrf.mxu0
        %v1710 = vadd.f32 %v1538, %v1709
        %v1711 = vpop.f32.mrf.mxu0
        %v1712 = vadd.f32 %v1538, %v1711
        %1713 = vmatmul.bf16.gmra.mxu0 %v1518
        %v1714 = vpop.f32.mrf.mxu0
        %v1715 = vadd.f32 %v1538, %v1714
        %v1716 = vpop.f32.mrf.mxu0
        %v1717 = vadd.f32 %v1538, %v1716
        %1718 = vdwg.mxu0
        %v1719 = vmax.f32 %v1631, 0.0
        %v1720 = vmax.f32 %v1680, 0.0
        %v1721 = vmax.f32 %v1633, 0.0
        %v1722 = vmax.f32 %v1682, 0.0
        %v1723 = vmax.f32 %v1636, 0.0
        %v1724 = vmax.f32 %v1685, 0.0
        %v1725 = vmax.f32 %v1638, 0.0
        %v1726 = vmax.f32 %v1687, 0.0
        %v1727 = vmax.f32 %v1641, 0.0
        %v1728 = vmax.f32 %v1690, 0.0
        %v1729 = vmax.f32 %v1643, 0.0
        %v1730 = vmax.f32 %v1692, 0.0
        %v1731 = vmax.f32 %v1646, 0.0
        %v1732 = vmax.f32 %v1695, 0.0
        %v1733 = vmax.f32 %v1648, 0.0
        %v1734 = vmax.f32 %v1697, 0.0
        %v1735 = vmax.f32 %v1651, 0.0
        %v1736 = vmax.f32 %v1700, 0.0
        %v1737 = vmax.f32 %v1653, 0.0
        %v1738 = vmax.f32 %v1702, 0.0
        %v1739 = vmax.f32 %v1656, 0.0
        %v1740 = vmax.f32 %v1705, 0.0
        %v1741 = vmax.f32 %v1658, 0.0
        %v1742 = vmax.f32 %v1707, 0.0
        %v1743 = vmax.f32 %v1661, 0.0
        %v1744 = vmax.f32 %v1710, 0.0
        %v1745 = vmax.f32 %v1663, 0.0
        %v1746 = vmax.f32 %v1712, 0.0
        %v1747 = vmax.f32 %v1666, 0.0
        %v1748 = vmax.f32 %v1715, 0.0
        %v1749 = vmax.f32 %v1668, 0.0
        %v1750 = vmax.f32 %v1717, 0.0
        %v1751 = vand.u32 2147483647, %v1631
        %v1752 = vand.u32 2147483647, %v1680
        %v1753 = vand.u32 2147483647, %v1633
        %v1754 = vand.u32 2147483647, %v1682
        %v1755 = vand.u32 2147483647, %v1636
        %v1756 = vand.u32 2147483647, %v1685
        %v1757 = vand.u32 2147483647, %v1638
        %v1758 = vand.u32 2147483647, %v1687
        %v1759 = vand.u32 2147483647, %v1641
        %v1760 = vand.u32 2147483647, %v1690
        %v1761 = vand.u32 2147483647, %v1643
        %v1762 = vand.u32 2147483647, %v1692
        %v1763 = vand.u32 2147483647, %v1646
        %v1764 = vand.u32 2147483647, %v1695
        %v1765 = vand.u32 2147483647, %v1648
        %v1766 = vand.u32 2147483647, %v1697
        %v1767 = vand.u32 2147483647, %v1651
        %v1768 = vand.u32 2147483647, %v1700
        %v1769 = vand.u32 2147483647, %v1653
        %v1770 = vand.u32 2147483647, %v1702
        %v1771 = vand.u32 2147483647, %v1656
        %v1772 = vand.u32 2147483647, %v1705
        %v1773 = vand.u32 2147483647, %v1658
        %v1774 = vand.u32 2147483647, %v1707
        %v1775 = vand.u32 2147483647, %v1661
        %v1776 = vand.u32 2147483647, %v1710
        %v1777 = vand.u32 2147483647, %v1663
        %v1778 = vand.u32 2147483647, %v1712
        %v1779 = vand.u32 2147483647, %v1666
        %v1780 = vand.u32 2147483647, %v1715
        %v1781 = vand.u32 2147483647, %v1668
        %v1782 = vand.u32 2147483647, %v1717
        %v1783 = vsub.f32 0.0, %v1751
        %v1784 = vsub.f32 0.0, %v1752
        %v1785 = vsub.f32 0.0, %v1753
        %v1786 = vsub.f32 0.0, %v1754
        %v1787 = vsub.f32 0.0, %v1755
        %v1788 = vsub.f32 0.0, %v1756
        %v1789 = vsub.f32 0.0, %v1757
        %v1790 = vsub.f32 0.0, %v1758
        %v1791 = vsub.f32 0.0, %v1759
        %v1792 = vsub.f32 0.0, %v1760
        %v1793 = vsub.f32 0.0, %v1761
        %v1794 = vsub.f32 0.0, %v1762
        %v1795 = vsub.f32 0.0, %v1763
        %v1796 = vsub.f32 0.0, %v1764
        %v1797 = vsub.f32 0.0, %v1765
        %v1798 = vsub.f32 0.0, %v1766
        %v1799 = vsub.f32 0.0, %v1767
        %v1800 = vsub.f32 0.0, %v1768
        %v1801 = vsub.f32 0.0, %v1769
        %v1802 = vsub.f32 0.0, %v1770
        %v1803 = vsub.f32 0.0, %v1771
        %v1804 = vsub.f32 0.0, %v1772
        %v1805 = vsub.f32 0.0, %v1773
        %v1806 = vsub.f32 0.0, %v1774
        %v1807 = vsub.f32 0.0, %v1775
        %v1808 = vsub.f32 0.0, %v1776
        %v1809 = vsub.f32 0.0, %v1777
        %v1810 = vsub.f32 0.0, %v1778
        %v1811 = vsub.f32 0.0, %v1779
        %v1812 = vsub.f32 0.0, %v1780
        %v1813 = vsub.f32 0.0, %v1781
        %v1814 = vsub.f32 0.0, %v1782
        %v1815 = vmul.f32 %v1783, 1.442695
        %v1816 = vpow.pop %v1815
        %v1817 = vmul.f32 %v1784, 1.442695
        %v1818 = vpow.pop %v1817
        %v1819 = vmul.f32 %v1785, 1.442695
        %v1820 = vpow.pop %v1819
        %v1821 = vmul.f32 %v1786, 1.442695
        %v1822 = vpow.pop %v1821
        %v1823 = vmul.f32 %v1787, 1.442695
        %v1824 = vpow.pop %v1823
        %v1825 = vmul.f32 %v1788, 1.442695
        %v1826 = vpow.pop %v1825
        %v1827 = vmul.f32 %v1789, 1.442695
        %v1828 = vpow.pop %v1827
        %v1829 = vmul.f32 %v1790, 1.442695
        %v1830 = vpow.pop %v1829
        %v1831 = vmul.f32 %v1791, 1.442695
        %v1832 = vpow.pop %v1831
        %v1833 = vmul.f32 %v1792, 1.442695
        %v1834 = vpow.pop %v1833
        %v1835 = vmul.f32 %v1793, 1.442695
        %v1836 = vpow.pop %v1835
        %v1837 = vmul.f32 %v1794, 1.442695
        %v1838 = vpow.pop %v1837
        %v1839 = vmul.f32 %v1795, 1.442695
        %v1840 = vpow.pop %v1839
        %v1841 = vmul.f32 %v1796, 1.442695
        %v1842 = vpow.pop %v1841
        %v1843 = vmul.f32 %v1797, 1.442695
        %v1844 = vpow.pop %v1843
        %v1845 = vmul.f32 %v1798, 1.442695
        %v1846 = vpow.pop %v1845
        %v1847 = vmul.f32 %v1799, 1.442695
        %v1848 = vpow.pop %v1847
        %v1849 = vmul.f32 %v1800, 1.442695
        %v1850 = vpow.pop %v1849
        %v1851 = vmul.f32 %v1801, 1.442695
        %v1852 = vpow.pop %v1851
        %v1853 = vmul.f32 %v1802, 1.442695
        %v1854 = vpow.pop %v1853
        %v1855 = vmul.f32 %v1803, 1.442695
        %v1856 = vpow.pop %v1855
        %v1857 = vmul.f32 %v1804, 1.442695
        %v1858 = vpow.pop %v1857
        %v1859 = vmul.f32 %v1805, 1.442695
        %v1860 = vpow.pop %v1859
        %v1861 = vmul.f32 %v1806, 1.442695
        %v1862 = vpow.pop %v1861
        %v1863 = vmul.f32 %v1807, 1.442695
        %v1864 = vpow.pop %v1863
        %v1865 = vmul.f32 %v1808, 1.442695
        %v1866 = vpow.pop %v1865
        %v1867 = vmul.f32 %v1809, 1.442695
        %v1868 = vpow.pop %v1867
        %v1869 = vmul.f32 %v1810, 1.442695
        %v1870 = vpow.pop %v1869
        %v1871 = vmul.f32 %v1811, 1.442695
        %v1872 = vpow.pop %v1871
        %v1873 = vmul.f32 %v1812, 1.442695
        %v1874 = vpow.pop %v1873
        %v1875 = vmul.f32 %v1813, 1.442695
        %v1876 = vpow.pop %v1875
        %v1877 = vmul.f32 %v1814, 1.442695
        %v1878 = vpow.pop %v1877
        %v1879 = vadd.f32 %v1816, 1.0
        %v1880 = vadd.f32 %v1818, 1.0
        %v1881 = vadd.f32 %v1820, 1.0
        %v1882 = vadd.f32 %v1822, 1.0
        %v1883 = vadd.f32 %v1824, 1.0
        %v1884 = vadd.f32 %v1826, 1.0
        %v1885 = vadd.f32 %v1828, 1.0
        %v1886 = vadd.f32 %v1830, 1.0
        %v1887 = vadd.f32 %v1832, 1.0
        %v1888 = vadd.f32 %v1834, 1.0
        %v1889 = vadd.f32 %v1836, 1.0
        %v1890 = vadd.f32 %v1838, 1.0
        %v1891 = vadd.f32 %v1840, 1.0
        %v1892 = vadd.f32 %v1842, 1.0
        %v1893 = vadd.f32 %v1844, 1.0
        %v1894 = vadd.f32 %v1846, 1.0
        %v1895 = vadd.f32 %v1848, 1.0
        %v1896 = vadd.f32 %v1850, 1.0
        %v1897 = vadd.f32 %v1852, 1.0
        %v1898 = vadd.f32 %v1854, 1.0
        %v1899 = vadd.f32 %v1856, 1.0
        %v1900 = vadd.f32 %v1858, 1.0
        %v1901 = vadd.f32 %v1860, 1.0
        %v1902 = vadd.f32 %v1862, 1.0
        %v1903 = vadd.f32 %v1864, 1.0
        %v1904 = vadd.f32 %v1866, 1.0
        %v1905 = vadd.f32 %v1868, 1.0
        %v1906 = vadd.f32 %v1870, 1.0
        %v1907 = vadd.f32 %v1872, 1.0
        %v1908 = vadd.f32 %v1874, 1.0
        %v1909 = vadd.f32 %v1876, 1.0
        %v1910 = vadd.f32 %v1878, 1.0
        %v1911 = vlog2.pop %v1879
        %v1912 = vmul.f32 %v1911, 0.6931472
        %v1913 = vlog2.pop %v1880
        %v1914 = vmul.f32 %v1913, 0.6931472
        %v1915 = vlog2.pop %v1881
        %v1916 = vmul.f32 %v1915, 0.6931472
        %v1917 = vlog2.pop %v1882
        %v1918 = vmul.f32 %v1917, 0.6931472
        %v1919 = vlog2.pop %v1883
        %v1920 = vmul.f32 %v1919, 0.6931472
        %v1921 = vlog2.pop %v1884
        %v1922 = vmul.f32 %v1921, 0.6931472
        %v1923 = vlog2.pop %v1885
        %v1924 = vmul.f32 %v1923, 0.6931472
        %v1925 = vlog2.pop %v1886
        %v1926 = vmul.f32 %v1925, 0.6931472
        %v1927 = vlog2.pop %v1887
        %v1928 = vmul.f32 %v1927, 0.6931472
        %v1929 = vlog2.pop %v1888
        %v1930 = vmul.f32 %v1929, 0.6931472
        %v1931 = vlog2.pop %v1889
        %v1932 = vmul.f32 %v1931, 0.6931472
        %v1933 = vlog2.pop %v1890
        %v1934 = vmul.f32 %v1933, 0.6931472
        %v1935 = vlog2.pop %v1891
        %v1936 = vmul.f32 %v1935, 0.6931472
        %v1937 = vlog2.pop %v1892
        %v1938 = vmul.f32 %v1937, 0.6931472
        %v1939 = vlog2.pop %v1893
        %v1940 = vmul.f32 %v1939, 0.6931472
        %v1941 = vlog2.pop %v1894
        %v1942 = vmul.f32 %v1941, 0.6931472
        %v1943 = vlog2.pop %v1895
        %v1944 = vmul.f32 %v1943, 0.6931472
        %v1945 = vlog2.pop %v1896
        %v1946 = vmul.f32 %v1945, 0.6931472
        %v1947 = vlog2.pop %v1897
        %v1948 = vmul.f32 %v1947, 0.6931472
        %v1949 = vlog2.pop %v1898
        %v1950 = vmul.f32 %v1949, 0.6931472
        %v1951 = vlog2.pop %v1899
        %v1952 = vmul.f32 %v1951, 0.6931472
        %v1953 = vlog2.pop %v1900
        %v1954 = vmul.f32 %v1953, 0.6931472
        %v1955 = vlog2.pop %v1901
        %v1956 = vmul.f32 %v1955, 0.6931472
        %v1957 = vlog2.pop %v1902
        %v1958 = vmul.f32 %v1957, 0.6931472
        %v1959 = vlog2.pop %v1903
        %v1960 = vmul.f32 %v1959, 0.6931472
        %v1961 = vlog2.pop %v1904
        %v1962 = vmul.f32 %v1961, 0.6931472
        %v1963 = vlog2.pop %v1905
        %v1964 = vmul.f32 %v1963, 0.6931472
        %v1965 = vlog2.pop %v1906
        %v1966 = vmul.f32 %v1965, 0.6931472
        %v1967 = vlog2.pop %v1907
        %v1968 = vmul.f32 %v1967, 0.6931472
        %v1969 = vlog2.pop %v1908
        %v1970 = vmul.f32 %v1969, 0.6931472
        %v1971 = vlog2.pop %v1909
        %v1972 = vmul.f32 %v1971, 0.6931472
        %v1973 = vlog2.pop %v1910
        %v1974 = vmul.f32 %v1973, 0.6931472
        %v1975 = vadd.f32 %v1719, %v1912
        %v1976 = vadd.f32 %v1720, %v1914
        %v1977 = vadd.f32 %v1721, %v1916
        %v1978 = vadd.f32 %v1722, %v1918
        %v1979 = vadd.f32 %v1723, %v1920
        %v1980 = vadd.f32 %v1724, %v1922
        %v1981 = vadd.f32 %v1725, %v1924
        %v1982 = vadd.f32 %v1726, %v1926
        %v1983 = vadd.f32 %v1727, %v1928
        %v1984 = vadd.f32 %v1728, %v1930
        %v1985 = vadd.f32 %v1729, %v1932
        %v1986 = vadd.f32 %v1730, %v1934
        %v1987 = vadd.f32 %v1731, %v1936
        %v1988 = vadd.f32 %v1732, %v1938
        %v1989 = vadd.f32 %v1733, %v1940
        %v1990 = vadd.f32 %v1734, %v1942
        %v1991 = vadd.f32 %v1735, %v1944
        %v1992 = vadd.f32 %v1736, %v1946
        %v1993 = vadd.f32 %v1737, %v1948
        %v1994 = vadd.f32 %v1738, %v1950
        %v1995 = vadd.f32 %v1739, %v1952
        %v1996 = vadd.f32 %v1740, %v1954
        %v1997 = vadd.f32 %v1741, %v1956
        %v1998 = vadd.f32 %v1742, %v1958
        %v1999 = vadd.f32 %v1743, %v1960
        %v2000 = vadd.f32 %v1744, %v1962
        %v2001 = vadd.f32 %v1745, %v1964
        %v2002 = vadd.f32 %v1746, %v1966
        %v2003 = vadd.f32 %v1747, %v1968
        %v2004 = vadd.f32 %v1748, %v1970
        %v2005 = vadd.f32 %v1749, %v1972
        %v2006 = vadd.f32 %v1750, %v1974
        %v2007 = vmul.f32 %v414, %v1631
        %v2008 = vmul.f32 %v415, %v1680
        %v2009 = vmul.f32 %v416, %v1633
        %v2010 = vmul.f32 %v417, %v1682
        %v2011 = vmul.f32 %v418, %v1636
        %v2012 = vmul.f32 %v419, %v1685
        %v2013 = vmul.f32 %v420, %v1638
        %v2014 = vmul.f32 %v421, %v1687
        %v2015 = vmul.f32 %v422, %v1641
        %v2016 = vmul.f32 %v423, %v1690
        %v2017 = vmul.f32 %v424, %v1643
        %v2018 = vmul.f32 %v425, %v1692
        %v2019 = vmul.f32 %v426, %v1646
        %v2020 = vmul.f32 %v427, %v1695
        %v2021 = vmul.f32 %v428, %v1648
        %v2022 = vmul.f32 %v429, %v1697
        %v2023 = vmul.f32 %v430, %v1651
        %v2024 = vmul.f32 %v431, %v1700
        %v2025 = vmul.f32 %v432, %v1653
        %v2026 = vmul.f32 %v433, %v1702
        %v2027 = vmul.f32 %v434, %v1656
        %v2028 = vmul.f32 %v435, %v1705
        %v2029 = vmul.f32 %v436, %v1658
        %v2030 = vmul.f32 %v437, %v1707
        %v2031 = vmul.f32 %v438, %v1661
        %v2032 = vmul.f32 %v439, %v1710
        %v2033 = vmul.f32 %v440, %v1663
        %v2034 = vmul.f32 %v441, %v1712
        %v2035 = vmul.f32 %v442, %v1666
        %v2036 = vmul.f32 %v443, %v1715
        %v2037 = vmul.f32 %v444, %v1668
        %v2038 = vmul.f32 %v445, %v1717
        %v2039 = vsub.f32 %v2007, %v1975
        %v2040 = vsub.f32 %v2008, %v1976
        %v2041 = vsub.f32 %v2009, %v1977
        %v2042 = vsub.f32 %v2010, %v1978
        %v2043 = vsub.f32 %v2011, %v1979
        %v2044 = vsub.f32 %v2012, %v1980
        %v2045 = vsub.f32 %v2013, %v1981
        %v2046 = vsub.f32 %v2014, %v1982
        %v2047 = vsub.f32 %v2015, %v1983
        %v2048 = vsub.f32 %v2016, %v1984
        %v2049 = vsub.f32 %v2017, %v1985
        %v2050 = vsub.f32 %v2018, %v1986
        %v2051 = vsub.f32 %v2019, %v1987
        %v2052 = vsub.f32 %v2020, %v1988
        %v2053 = vsub.f32 %v2021, %v1989
        %v2054 = vsub.f32 %v2022, %v1990
        %v2055 = vsub.f32 %v2023, %v1991
        %v2056 = vsub.f32 %v2024, %v1992
        %v2057 = vsub.f32 %v2025, %v1993
        %v2058 = vsub.f32 %v2026, %v1994
        %v2059 = vsub.f32 %v2027, %v1995
        %v2060 = vsub.f32 %v2028, %v1996
        %v2061 = vsub.f32 %v2029, %v1997
        %v2062 = vsub.f32 %v2030, %v1998
        %v2063 = vsub.f32 %v2031, %v1999
        %v2064 = vsub.f32 %v2032, %v2000
        %v2065 = vsub.f32 %v2033, %v2001
        %v2066 = vsub.f32 %v2034, %v2002
        %v2067 = vsub.f32 %v2035, %v2003
        %v2068 = vsub.f32 %v2036, %v2004
        %v2069 = vsub.f32 %v2037, %v2005
        %v2070 = vsub.f32 %v2038, %v2006
        %v2071 = vadd.f32 %v2039, %v2040
        %2072 = vadd.xlane.f32.xlu0 %v2071
        %v2073 = vpop.xlane.xlu0 %2072
        %v2074 = vadd.f32 %v2041, %v2042
        %2075 = vadd.xlane.f32.xlu0 %v2074
        %v2076 = vpop.xlane.xlu0 %2075
        %v2077 = vadd.f32 %v2043, %v2044
        %2078 = vadd.xlane.f32.xlu0 %v2077
        %v2079 = vpop.xlane.xlu0 %2078
        %v2080 = vadd.f32 %v2045, %v2046
        %2081 = vadd.xlane.f32.xlu0 %v2080
        %v2082 = vpop.xlane.xlu0 %2081
        %v2083 = vadd.f32 %v2047, %v2048
        %2084 = vadd.xlane.f32.xlu0 %v2083
        %v2085 = vpop.xlane.xlu0 %2084
        %v2086 = vadd.f32 %v2049, %v2050
        %2087 = vadd.xlane.f32.xlu0 %v2086
        %v2088 = vpop.xlane.xlu0 %2087
        %v2089 = vadd.f32 %v2051, %v2052
        %2090 = vadd.xlane.f32.xlu0 %v2089
        %v2091 = vpop.xlane.xlu0 %2090
        %v2092 = vadd.f32 %v2053, %v2054
        %2093 = vadd.xlane.f32.xlu0 %v2092
        %v2094 = vpop.xlane.xlu0 %2093
        %v2095 = vadd.f32 %v2055, %v2056
        %2096 = vadd.xlane.f32.xlu0 %v2095
        %v2097 = vpop.xlane.xlu0 %2096
        %v2098 = vadd.f32 %v2057, %v2058
        %2099 = vadd.xlane.f32.xlu0 %v2098
        %v2100 = vpop.xlane.xlu0 %2099
        %v2101 = vadd.f32 %v2059, %v2060
        %2102 = vadd.xlane.f32.xlu0 %v2101
        %v2103 = vpop.xlane.xlu0 %2102
        %v2104 = vadd.f32 %v2061, %v2062
        %2105 = vadd.xlane.f32.xlu0 %v2104
        %v2106 = vpop.xlane.xlu0 %2105
        %v2107 = vadd.f32 %v2063, %v2064
        %2108 = vadd.xlane.f32.xlu0 %v2107
        %v2109 = vpop.xlane.xlu0 %2108
        %v2110 = vadd.f32 %v2065, %v2066
        %2111 = vadd.xlane.f32.xlu0 %v2110
        %v2112 = vpop.xlane.xlu0 %2111
        %v2113 = vadd.f32 %v2067, %v2068
        %2114 = vadd.xlane.f32.xlu0 %v2113
        %v2115 = vpop.xlane.xlu0 %2114
        %v2116 = vadd.f32 %v2069, %v2070
        %2117 = vadd.xlane.f32.xlu0 %v2116
        %v2118 = vpop.xlane.xlu0 %2117
        %v2119 = vld [vmem:[#allocation2] sm:$0xff]
        %v2120 = vld [vmem:[#allocation2 + $0x8] sm:$0xff]
        %v2121 = vld [vmem:[#allocation2 + $0x10] sm:$0xff]
        %v2122 = vld [vmem:[#allocation2 + $0x18] sm:$0xff]
        %v2123 = vld [vmem:[#allocation2 + $0x20] sm:$0xff]
        %v2124 = vld [vmem:[#allocation2 + $0x28] sm:$0xff]
        %v2125 = vld [vmem:[#allocation2 + $0x30] sm:$0xff]
        %v2126 = vld [vmem:[#allocation2 + $0x38] sm:$0xff]
        %v2127 = vld [vmem:[#allocation2 + $0x40] sm:$0xff]
        %v2128 = vld [vmem:[#allocation2 + $0x48] sm:$0xff]
        %v2129 = vld [vmem:[#allocation2 + $0x50] sm:$0xff]
        %v2130 = vld [vmem:[#allocation2 + $0x58] sm:$0xff]
        %v2131 = vld [vmem:[#allocation2 + $0x60] sm:$0xff]
        %v2132 = vld [vmem:[#allocation2 + $0x68] sm:$0xff]
        %v2133 = vld [vmem:[#allocation2 + $0x70] sm:$0xff]
        %v2134 = vld [vmem:[#allocation2 + $0x78] sm:$0xff]
        %v2135 = vsub.f32 %v1362, %v2073
        %v2136 = vsub.f32 %v1363, %v2076
        %v2137 = vsub.f32 %v1364, %v2079
        %v2138 = vsub.f32 %v1365, %v2082
        %v2139 = vsub.f32 %v1366, %v2085
        %v2140 = vsub.f32 %v1367, %v2088
        %v2141 = vsub.f32 %v1368, %v2091
        %v2142 = vsub.f32 %v1369, %v2094
        %v2143 = vsub.f32 %v1370, %v2097
        %v2144 = vsub.f32 %v1371, %v2100
        %v2145 = vsub.f32 %v1372, %v2103
        %v2146 = vsub.f32 %v1373, %v2106
        %v2147 = vsub.f32 %v1374, %v2109
        %v2148 = vsub.f32 %v1375, %v2112
        %v2149 = vsub.f32 %v1376, %v2115
        %v2150 = vsub.f32 %v1377, %v2118
        %v2151 = vadd.f32 %v2119, %v2135
        %v2152 = vadd.f32 %v2120, %v2136
        %v2153 = vadd.f32 %v2121, %v2137
        %v2154 = vadd.f32 %v2122, %v2138
        %v2155 = vadd.f32 %v2123, %v2139
        %v2156 = vadd.f32 %v2124, %v2140
        %v2157 = vadd.f32 %v2125, %v2141
        %v2158 = vadd.f32 %v2126, %v2142
        %v2159 = vadd.f32 %v2127, %v2143
        %v2160 = vadd.f32 %v2128, %v2144
        %v2161 = vadd.f32 %v2129, %v2145
        %v2162 = vadd.f32 %v2130, %v2146
        %v2163 = vadd.f32 %v2131, %v2147
        %v2164 = vadd.f32 %v2132, %v2148
        %v2165 = vadd.f32 %v2133, %v2149
        %v2166 = vadd.f32 %v2134, %v2150
        %vm2167 = vcmask 7168
        %2168 = vst.msk [vmem:[#allocation2] sm:$0xff] %vm2167, %v2151
        %2169 = vst.msk [vmem:[#allocation2 + $0x8] sm:$0xff] %vm2167, %v2152
        %2170 = vst.msk [vmem:[#allocation2 + $0x10] sm:$0xff] %vm2167, %v2153
        %2171 = vst.msk [vmem:[#allocation2 + $0x18] sm:$0xff] %vm2167, %v2154
        %2172 = vst.msk [vmem:[#allocation2 + $0x20] sm:$0xff] %vm2167, %v2155
        %2173 = vst.msk [vmem:[#allocation2 + $0x28] sm:$0xff] %vm2167, %v2156
        %2174 = vst.msk [vmem:[#allocation2 + $0x30] sm:$0xff] %vm2167, %v2157
        %2175 = vst.msk [vmem:[#allocation2 + $0x38] sm:$0xff] %vm2167, %v2158
        %2176 = vst.msk [vmem:[#allocation2 + $0x40] sm:$0xff] %vm2167, %v2159
        %2177 = vst.msk [vmem:[#allocation2 + $0x48] sm:$0xff] %vm2167, %v2160
        %2178 = vst.msk [vmem:[#allocation2 + $0x50] sm:$0xff] %vm2167, %v2161
        %2179 = vst.msk [vmem:[#allocation2 + $0x58] sm:$0xff] %vm2167, %v2162
        %2180 = vst.msk [vmem:[#allocation2 + $0x60] sm:$0xff] %vm2167, %v2163
        %2181 = vst.msk [vmem:[#allocation2 + $0x68] sm:$0xff] %vm2167, %v2164
        %2182 = vst.msk [vmem:[#allocation2 + $0x70] sm:$0xff] %vm2167, %v2165
        %2183 = vst.msk [vmem:[#allocation2 + $0x78] sm:$0xff] %vm2167, %v2166
        %p2184 = scmp.eq.s32.totalorder %s25, 1
        // Predicated region
        $region69: #{tpu_custom_call.1} parent=59 // pred_check
          %p2185 = pneg %p2184
        $region70: #{tpu_custom_call.1} parent=59 // pred_check_branch
          %2187 = sbr.rel (%p2185) target = $region72
        $region71: #{tpu_custom_call.1} parent=59 // pred_region
          %v2188 = vld [vmem:[#allocation2] sm:$0xff]
          %v2189 = vld [vmem:[#allocation2 + $0x8] sm:$0xff]
          %v2190 = vld [vmem:[#allocation2 + $0x10] sm:$0xff]
          %v2191 = vld [vmem:[#allocation2 + $0x18] sm:$0xff]
          %v2192 = vld [vmem:[#allocation2 + $0x20] sm:$0xff]
          %v2193 = vld [vmem:[#allocation2 + $0x28] sm:$0xff]
          %v2194 = vld [vmem:[#allocation2 + $0x30] sm:$0xff]
          %v2195 = vld [vmem:[#allocation2 + $0x38] sm:$0xff]
          %v2196 = vld [vmem:[#allocation2 + $0x40] sm:$0xff]
          %v2197 = vld [vmem:[#allocation2 + $0x48] sm:$0xff]
          %v2198 = vld [vmem:[#allocation2 + $0x50] sm:$0xff]
          %v2199 = vld [vmem:[#allocation2 + $0x58] sm:$0xff]
          %v2200 = vld [vmem:[#allocation2 + $0x60] sm:$0xff]
          %v2201 = vld [vmem:[#allocation2 + $0x68] sm:$0xff]
          %v2202 = vld [vmem:[#allocation2 + $0x70] sm:$0xff]
          %v2203 = vld [vmem:[#allocation2 + $0x78] sm:$0xff]
          %v2204 = vsel %vm2167, %v2188, 0.0
          %v2205 = vsel %vm2167, %v2189, 0.0
          %v2206 = vadd.f32 %v2204, %v2205
          %v2207 = vsel %vm2167, %v2190, 0.0
          %v2208 = vadd.f32 %v2206, %v2207
          %v2209 = vsel %vm2167, %v2191, 0.0
          %v2210 = vadd.f32 %v2208, %v2209
          %v2211 = vsel %vm2167, %v2192, 0.0
          %v2212 = vadd.f32 %v2210, %v2211
          %v2213 = vsel %vm2167, %v2193, 0.0
          %v2214 = vadd.f32 %v2212, %v2213
          %v2215 = vsel %vm2167, %v2194, 0.0
          %v2216 = vadd.f32 %v2214, %v2215
          %v2217 = vsel %vm2167, %v2195, 0.0
          %v2218 = vadd.f32 %v2216, %v2217
          %v2219 = vsel %vm2167, %v2196, 0.0
          %v2220 = vadd.f32 %v2218, %v2219
          %v2221 = vsel %vm2167, %v2197, 0.0
          %v2222 = vadd.f32 %v2220, %v2221
          %v2223 = vsel %vm2167, %v2198, 0.0
          %v2224 = vadd.f32 %v2222, %v2223
          %v2225 = vsel %vm2167, %v2199, 0.0
          %v2226 = vadd.f32 %v2224, %v2225
          %v2227 = vsel %vm2167, %v2200, 0.0
          %v2228 = vadd.f32 %v2226, %v2227
          %v2229 = vsel %vm2167, %v2201, 0.0
          %v2230 = vadd.f32 %v2228, %v2229
          %v2231 = vsel %vm2167, %v2202, 0.0
          %v2232 = vadd.f32 %v2230, %v2231
          %v2233 = vsel %vm2167, %v2203, 0.0
          %v2234 = vadd.f32 %v2232, %v2233
          %2235 = vadd.xlane.f32.xlu0 %v2234
          %v2236 = vpop.xlane.xlu0 %2235
          %v2237 = vrot.slane %v2236, 4
          %v2238 = vadd.f32 %v2236, %v2237
          %v2239 = vrot.slane %v2238, 2
          %v2240 = vadd.f32 %v2238, %v2239
          %v2241 = vrot.slane %v2240, 1
          %v2242 = vadd.f32 %v2240, %v2241
          %s2243 = vtos %v2242
          %s2244 = smul.f32 %s2243, 0.00390625
          %s2245 = scalar_lea.smem [#allocation6], 0
          %2246 = sst [smem:[%s2245]] %s2244
        $region72: #{tpu_custom_call.1} parent=59 // pred_fallthru
          _
        // Predicated region
        $region73: #{tpu_custom_call.1} parent=59 // pred_check
          %p2247 = pneg %p258
        $region74: #{tpu_custom_call.1} parent=59 // pred_check_branch
          %2249 = sbr.rel (%p2247) target = $region76
        $region75: #{tpu_custom_call.1} parent=59 // pred_region
          %2251 = vsyncadd [#allocation5], 0
          %s2253 = sshll.u32 %s10, 4
          %s2254 = int_to_ptr.hbm [resolvable:$true] %s2253
          %2256 = dma.smem_to_hbm [#allocation6], 16, %s2254, [#allocation5]
        $region76: #{tpu_custom_call.1} parent=59 // pred_fallthru
          _
        // Predicated region
        $region77: #{tpu_custom_call.1} parent=59 // pred_check
          %p2257 = pneg %p258
        $region78: #{tpu_custom_call.1} parent=59 // pred_check_branch
          %2259 = sbr.rel (%p2257) target = $region80
        $region79: #{tpu_custom_call.1} parent=59 // pred_region
          %2261 = dma.done [#allocation5], 16
        $region80: #{tpu_custom_call.1} parent=59 // pred_fallthru
          _
        %2262 = sfence
      $region60: #{tpu_custom_call.1} parent=5 // pred_fallthru
        _
      %p2263 = scmp.le.s32.totalorder 2, %s20
      // Predicated region
      $region81: #{tpu_custom_call.1} parent=5 // pred_check
        %p2264 = pneg %p2263
      $region82: #{tpu_custom_call.1} parent=5 // pred_check_branch
        %2266 = sbr.rel (%p2264) target = $region84
      $region83: #{tpu_custom_call.1} parent=5 // pred_region
        %s2267 = ssub.s32 %s20, 2
      $region84: #{tpu_custom_call.1} parent=5 // pred_fallthru
        _
    $region6: #{tpu_custom_call.1} parent=1 // loop_footer
      %s24 = sadd.s32 1, %s20
    $region7: #{tpu_custom_call.1} parent=1 // loop_footer_branch
      %19 = sbr.rel target = $region3
    $region8: #{tpu_custom_call.1} parent=1 // loop_exit
      _
    %2268 = vsyncpa [#allocation4], 1
    %s2269 = scalar_lea.sflag [#allocation4], 1
    %2270 = vsyncpa %s2269, 1
    %2271 = vsyncpa [#allocation5], 1
    %s2272 = scalar_lea.sflag [#allocation5], 1
    %2273 = vsyncpa %s2272, 1

</llo_original>
